<compile_context>
chip_gen: v7x
topology: tpu7x:2x2x1
jax: 0.10.0
libtpu: 0.0.40
codegen_flags: <defaults>
</compile_context>

<pallas_src>
import functools

import jax
import jax.numpy as jnp
from jax.experimental import pallas as pl
from jax.experimental.pallas import tpu as pltpu

Z_DIM = 100          # latent size (fixed by the module: Linear(100 + C, 256))
H1, H2 = 256, 512    # hidden widths
K_PAD = 128          # (z ++ labels) padded to a lane-aligned contraction dim


def _generator_kernel(zin_ref, w1_ref, b1_ref, w2_ref, b2_ref,
                      w3_ref, b3_ref, o_ref):
    # --- Layer 1: fused [z, labels] matmul + bias + ReLU (bf16 -> f32 acc) ---
    h1 = jnp.dot(zin_ref[...], w1_ref[...], preferred_element_type=jnp.float32)
    h1 = jnp.maximum(h1 + b1_ref[...], 0.0)

    # --- Layer 2: Linear + ReLU ------------------------------------------------
    h2 = jnp.dot(h1.astype(w2_ref.dtype), w2_ref[...],
                 preferred_element_type=jnp.float32)
    h2 = jnp.maximum(h2 + b2_ref[...], 0.0)

    # --- Layer 3: Linear + Sigmoid (true 588-wide output, lane-masked tail) ---
    h3 = jnp.dot(h2.astype(w3_ref.dtype), w3_ref[...],
                 preferred_element_type=jnp.float32)
    x = h3 + b3_ref[...]
    # sigmoid(x) == 0.5 * (tanh(x/2) + 1): single EUP op per element.
    o_ref[...] = (0.5 * (jnp.tanh(0.5 * x) + 1.0)).astype(o_ref.dtype)


def conditional_gan_forward(z, labels, params, in_channels, *, tile_b=512):
    """Generator MLP in one batch-tiled Pallas kernel; output reshaped like
    PyTorch's x.view(-1, in_channels, 7, 7, 3)."""
    w1, b1, w2, b2, w3, b3 = params
    out_dim = in_channels * 7 * 7 * 3          # 588 for in_channels=4
    num_classes = labels.shape[1]
    k_in = Z_DIM + num_classes
    k_pad = w1.shape[0]                        # 128 (zero-padded contraction)
    B = z.shape[0]

    # Batch tiling. Large B: fixed tile_b rows/step. Small B: aim for >= 2 grid
    # steps (v7x has 2 TensorCores) while staying sublane (8) aligned.
    if B > tile_b:
        tb = tile_b
    else:
        tb = max(8, (((B + 1) // 2 + 7) // 8) * 8)
    n_steps = pl.cdiv(B, tb)
    b_pad = n_steps * tb

    # Fused concat([z, labels]) + zero-pad (rows to b_pad, cols to 128) + bf16
    # cast; a single tiny wrapper fusion, removes the extra K=4 MXU pass.
    zin = jnp.concatenate([z, labels], axis=-1).astype(w1.dtype)
    zin = jnp.pad(zin, ((0, b_pad - B), (0, k_pad - k_in)))

    # Weights/biases: constant block index -> fetched once, VMEM-resident.
    def resident(arr):
        return pl.BlockSpec(arr.shape, lambda i: (0, 0))

    flat = pl.pallas_call(
        _generator_kernel,
        out_shape=jax.ShapeDtypeStruct((b_pad, out_dim), jnp.float32),
        grid=(n_steps,),
        in_specs=[
            pl.BlockSpec((tb, k_pad), lambda i: (i, 0)),   # [z|labels] tile
            resident(w1), resident(b1),
            resident(w2), resident(b2),
            resident(w3), resident(b3),
        ],
        out_specs=pl.BlockSpec((tb, out_dim), lambda i: (i, 0)),
        compiler_params=pltpu.CompilerParams(
            dimension_semantics=("parallel",),   # megacore sharding on v7x
            vmem_limit_bytes=32 << 20,
        ),
    )(zin, w1, b1, w2, b2, w3, b3)

    if b_pad != B:                               # drop padded batch rows only
        flat = flat[:B]
    return flat.reshape(-1, in_channels, 7, 7, 3)


def init_params(key, in_channels, num_classes, *, param_dtype=jnp.bfloat16):
    """PyTorch-style uniform(+/- 1/sqrt(fan_in)) init, laid out for the kernel:
    W1 row-padded to K=128 (zeros for the padded [z|labels] columns), W3/b3 at
    their true 588 width, weights in bf16 (f32 accumulation), biases in f32."""
    out_dim = in_channels * 7 * 7 * 3
    dims = [Z_DIM + num_classes, H1, H2, out_dim]

    raw = []
    for i in range(3):
        fan_in, fan_out = dims[i], dims[i + 1]
        key, kw, kb = jax.random.split(key, 3)
        bound = 1.0 / (fan_in ** 0.5)
        w = jax.random.uniform(kw, (fan_in, fan_out), jnp.float32, -bound, bound)
        b = jax.random.uniform(kb, (1, fan_out), jnp.float32, -bound, bound)
        raw += [w, b]
    w1, b1, w2, b2, w3, b3 = raw

    w1p = jnp.pad(w1, ((0, K_PAD - w1.shape[0]), (0, 0))).astype(param_dtype)
    return (w1p, b1,
            w2.astype(param_dtype), b2,
            w3.astype(param_dtype), b3)


if __name__ == "__main__":
    in_channels = 4
    num_classes = 4
    batch = 2

    key = jax.random.PRNGKey(0)
    kp, kz, kl = jax.random.split(key, 3)

    params = init_params(kp, in_channels, num_classes)
    z = jax.random.normal(kz, (batch, Z_DIM), jnp.float32)
    labels = jax.nn.one_hot(
        jax.random.randint(kl, (batch,), 0, num_classes), num_classes
    ).astype(jnp.float32)

    fwd = jax.jit(functools.partial(conditional_gan_forward,
                                    in_channels=in_channels))
    out = jax.block_until_ready(fwd(z, labels, params))

    assert out.shape == (batch, in_channels, 7, 7, 3), out.shape
    assert bool(jnp.all((out >= 0.0) & (out <= 1.0)))   # sigmoid range
    print("KERNEL_OK")
</pallas_src>

<mosaic_0001>
module attributes {stable_mosaic.version = 11 : i64} {
  func.func @_generator_kernel(%arg0: i32, %arg1: memref<8x128xbf16, #tpu.memory_space<vmem>>, %arg2: memref<128x256xbf16, #tpu.memory_space<vmem>>, %arg3: memref<1x256xf32, #tpu.memory_space<vmem>>, %arg4: memref<256x512xbf16, #tpu.memory_space<vmem>>, %arg5: memref<1x512xf32, #tpu.memory_space<vmem>>, %arg6: memref<512x588xbf16, #tpu.memory_space<vmem>>, %arg7: memref<1x588xf32, #tpu.memory_space<vmem>>, %arg8: memref<8x588xf32, #tpu.memory_space<vmem>>) attributes {dimension_semantics = [#tpu.dimension_semantics<parallel>], iteration_bounds = array<i64: 1>, scalar_prefetch = 0 : i64, scratch_operands = 0 : i64, tpu.core_type = #tpu.core_type<tc>, window_params = [{transform_indices = @transform_0, window_bounds = array<i64: 8, 128>}, {pipeline_mode = #tpu.pipeline_mode<synchronous>, transform_indices = @transform_1, window_bounds = array<i64: 128, 256>}, {pipeline_mode = #tpu.pipeline_mode<synchronous>, transform_indices = @transform_2, window_bounds = array<i64: 1, 256>}, {pipeline_mode = #tpu.pipeline_mode<synchronous>, transform_indices = @transform_3, window_bounds = array<i64: 256, 512>}, {pipeline_mode = #tpu.pipeline_mode<synchronous>, transform_indices = @transform_4, window_bounds = array<i64: 1, 512>}, {pipeline_mode = #tpu.pipeline_mode<synchronous>, transform_indices = @transform_5, window_bounds = array<i64: 512, 588>}, {pipeline_mode = #tpu.pipeline_mode<synchronous>, transform_indices = @transform_6, window_bounds = array<i64: 1, 588>}, {transform_indices = @transform_7, window_bounds = array<i64: 8, 588>}]} {
    %c0 = arith.constant 0 : index
    %c0_0 = arith.constant 0 : index
    %0 = vector.load %arg1[%c0, %c0_0] : memref<8x128xbf16, #tpu.memory_space<vmem>>, vector<8x128xbf16>
    %c0_1 = arith.constant 0 : index
    %c0_2 = arith.constant 0 : index
    %1 = vector.load %arg2[%c0_1, %c0_2] : memref<128x256xbf16, #tpu.memory_space<vmem>>, vector<128x256xbf16>
    %cst = arith.constant dense<0.000000e+00> : vector<8x256xf32>
    %2 = tpu.matmul %0, %1, %cst {dimension_numbers = #tpu.dot_dimension_numbers<[1], [0], [0], [1], [0, 0, 1, 1], [], []>} : vector<8x128xbf16>, vector<128x256xbf16>, vector<8x256xf32> -> vector<8x256xf32>
    %c0_3 = arith.constant 0 : index
    %c0_4 = arith.constant 0 : index
    %3 = vector.load %arg3[%c0_3, %c0_4] : memref<1x256xf32, #tpu.memory_space<vmem>>, vector<1x256xf32>
    %4 = vector.broadcast %3 : vector<1x256xf32> to vector<8x256xf32>
    %5 = arith.addf %2, %4 : vector<8x256xf32>
    %cst_5 = arith.constant 0.000000e+00 : f32
    %6 = vector.broadcast %cst_5 : f32 to vector<8x256xf32>
    %7 = arith.maximumf %5, %6 : vector<8x256xf32>
    %8 = arith.truncf %7 : vector<8x256xf32> to vector<8x256xbf16>
    %c0_6 = arith.constant 0 : index
    %c0_7 = arith.constant 0 : index
    %9 = vector.load %arg4[%c0_6, %c0_7] : memref<256x512xbf16, #tpu.memory_space<vmem>>, vector<256x512xbf16>
    %cst_8 = arith.constant dense<0.000000e+00> : vector<8x512xf32>
    %10 = tpu.matmul %8, %9, %cst_8 {dimension_numbers = #tpu.dot_dimension_numbers<[1], [0], [0], [1], [0, 0, 1, 1], [], []>} : vector<8x256xbf16>, vector<256x512xbf16>, vector<8x512xf32> -> vector<8x512xf32>
    %c0_9 = arith.constant 0 : index
    %c0_10 = arith.constant 0 : index
    %11 = vector.load %arg5[%c0_9, %c0_10] : memref<1x512xf32, #tpu.memory_space<vmem>>, vector<1x512xf32>
    %12 = vector.broadcast %11 : vector<1x512xf32> to vector<8x512xf32>
    %13 = arith.addf %10, %12 : vector<8x512xf32>
    %cst_11 = arith.constant 0.000000e+00 : f32
    %14 = vector.broadcast %cst_11 : f32 to vector<8x512xf32>
    %15 = arith.maximumf %13, %14 : vector<8x512xf32>
    %16 = arith.truncf %15 : vector<8x512xf32> to vector<8x512xbf16>
    %c0_12 = arith.constant 0 : index
    %c0_13 = arith.constant 0 : index
    %17 = vector.load %arg6[%c0_12, %c0_13] : memref<512x588xbf16, #tpu.memory_space<vmem>>, vector<512x588xbf16>
    %cst_14 = arith.constant dense<0.000000e+00> : vector<8x588xf32>
    %18 = tpu.matmul %16, %17, %cst_14 {dimension_numbers = #tpu.dot_dimension_numbers<[1], [0], [0], [1], [0, 0, 1, 1], [], []>} : vector<8x512xbf16>, vector<512x588xbf16>, vector<8x588xf32> -> vector<8x588xf32>
    %c0_15 = arith.constant 0 : index
    %c0_16 = arith.constant 0 : index
    %19 = vector.load %arg7[%c0_15, %c0_16] : memref<1x588xf32, #tpu.memory_space<vmem>>, vector<1x588xf32>
    %20 = vector.broadcast %19 : vector<1x588xf32> to vector<8x588xf32>
    %21 = arith.addf %18, %20 : vector<8x588xf32>
    %cst_17 = arith.constant 5.000000e-01 : f32
    %22 = vector.broadcast %cst_17 : f32 to vector<8x588xf32>
    %23 = arith.mulf %22, %21 : vector<8x588xf32>
    %24 = math.tanh %23 : vector<8x588xf32>
    %cst_18 = arith.constant 1.000000e+00 : f32
    %25 = vector.broadcast %cst_18 : f32 to vector<8x588xf32>
    %26 = arith.addf %24, %25 : vector<8x588xf32>
    %cst_19 = arith.constant 5.000000e-01 : f32
    %27 = vector.broadcast %cst_19 : f32 to vector<8x588xf32>
    %28 = arith.mulf %27, %26 : vector<8x588xf32>
    %c0_20 = arith.constant 0 : index
    %c0_21 = arith.constant 0 : index
    %29 = vector.load %arg8[%c0_20, %c0_21] : memref<8x588xf32, #tpu.memory_space<vmem>>, vector<8x588xf32>
    tpu.vector_store %arg8[%c0_20, %c0_21], %28 {strides = array<i32>} : memref<8x588xf32, #tpu.memory_space<vmem>>, vector<8x588xf32>,
    return
  }
  func.func @transform_0(%arg0: i32) -> (i32, i32) {
    %c0_i32 = arith.constant 0 : i32
    %c0_i32_0 = arith.constant 0 : i32
    return %arg0, %c0_i32 : i32, i32
  }
  func.func @transform_1(%arg0: i32) -> (i32, i32) {
    %c0_i32 = arith.constant 0 : i32
    %c0_i32_0 = arith.constant 0 : i32
    %c0_i32_1 = arith.constant 0 : i32
    return %c0_i32, %c0_i32_0 : i32, i32
  }
  func.func @transform_2(%arg0: i32) -> (i32, i32) {
    %c0_i32 = arith.constant 0 : i32
    %c0_i32_0 = arith.constant 0 : i32
    %c0_i32_1 = arith.constant 0 : i32
    return %c0_i32, %c0_i32_0 : i32, i32
  }
  func.func @transform_3(%arg0: i32) -> (i32, i32) {
    %c0_i32 = arith.constant 0 : i32
    %c0_i32_0 = arith.constant 0 : i32
    %c0_i32_1 = arith.constant 0 : i32
    return %c0_i32, %c0_i32_0 : i32, i32
  }
  func.func @transform_4(%arg0: i32) -> (i32, i32) {
    %c0_i32 = arith.constant 0 : i32
    %c0_i32_0 = arith.constant 0 : i32
    %c0_i32_1 = arith.constant 0 : i32
    return %c0_i32, %c0_i32_0 : i32, i32
  }
  func.func @transform_5(%arg0: i32) -> (i32, i32) {
    %c0_i32 = arith.constant 0 : i32
    %c0_i32_0 = arith.constant 0 : i32
    %c0_i32_1 = arith.constant 0 : i32
    return %c0_i32, %c0_i32_0 : i32, i32
  }
  func.func @transform_6(%arg0: i32) -> (i32, i32) {
    %c0_i32 = arith.constant 0 : i32
    %c0_i32_0 = arith.constant 0 : i32
    %c0_i32_1 = arith.constant 0 : i32
    return %c0_i32, %c0_i32_0 : i32, i32
  }
  func.func @transform_7(%arg0: i32) -> (i32, i32) {
    %c0_i32 = arith.constant 0 : i32
    %c0_i32_0 = arith.constant 0 : i32
    return %arg0, %c0_i32 : i32, i32
  }
}

</mosaic_0001>

<llo_original>
// kernel: conditional_gan_forward.1
$region0: #{conditional_gan_forward.1}
  #allocation0 [shape = 'u32[]', space=smem, size = 0x4, offset = 0x4, fixed_abs, tag = 'smem constant byte address 0x4 - core index']
  #allocation1 [shape = 'u32[144,128]{1,0:T(1,128)}', space=vmem, size = 0x12000, scoped, tag = 'internal scratch']
  %s0 = inlined_call_operand.vmem [shape: bf16[8,128], index: 0, kind: input, shape index: {}]
  %s1 = inlined_call_operand.vmem [shape: bf16[128,256], index: 1, kind: input, shape index: {}]
  %s2 = inlined_call_operand.vmem [shape: f32[1,256], index: 2, kind: input, shape index: {}]
  %s3 = inlined_call_operand.vmem [shape: bf16[256,512], index: 3, kind: input, shape index: {}]
  %s4 = inlined_call_operand.vmem [shape: f32[1,512], index: 4, kind: input, shape index: {}]
  %s5 = inlined_call_operand.vmem [shape: bf16[512,588], index: 5, kind: input, shape index: {}]
  %s6 = inlined_call_operand.vmem [shape: f32[1,588], index: 6, kind: input, shape index: {}]
  %s7 = inlined_call_operand.vmem [shape: f32[8,588], index: 7, kind: output, shape index: {}]
  %s8 = sld [smem:[#allocation0]]
  $region38: #{conditional_gan_forward.1} parent=0
    _
  %s10 = ssub.s32 1, %s8
  %s11 = scalar_select 0, %s10, %s8
  // Predicated region
  $region2: #{conditional_gan_forward.1} parent=0 // pred_check
    _
  $region3: #{conditional_gan_forward.1} parent=0 // pred_check_branch
    %13 = sbr.rel (0) target = $region5
  $region4: #{conditional_gan_forward.1} parent=0 // pred_region
    _
  $region5: #{conditional_gan_forward.1} parent=0 // pred_fallthru
    _
  // Predicated region
  $region6: #{conditional_gan_forward.1} parent=0 // pred_check
    _
  $region7: #{conditional_gan_forward.1} parent=0 // pred_check_branch
    %15 = sbr.rel (0) target = $region9
  $region8: #{conditional_gan_forward.1} parent=0 // pred_region
    _
  $region9: #{conditional_gan_forward.1} parent=0 // pred_fallthru
    _
  // Predicated region
  $region10: #{conditional_gan_forward.1} parent=0 // pred_check
    _
  $region11: #{conditional_gan_forward.1} parent=0 // pred_check_branch
    %17 = sbr.rel (0) target = $region13
  $region12: #{conditional_gan_forward.1} parent=0 // pred_region
    _
  $region13: #{conditional_gan_forward.1} parent=0 // pred_fallthru
    _
  // Predicated region
  $region14: #{conditional_gan_forward.1} parent=0 // pred_check
    _
  $region15: #{conditional_gan_forward.1} parent=0 // pred_check_branch
    %19 = sbr.rel (0) target = $region17
  $region16: #{conditional_gan_forward.1} parent=0 // pred_region
    _
  $region17: #{conditional_gan_forward.1} parent=0 // pred_fallthru
    _
  // Predicated region
  $region18: #{conditional_gan_forward.1} parent=0 // pred_check
    _
  $region19: #{conditional_gan_forward.1} parent=0 // pred_check_branch
    %21 = sbr.rel (0) target = $region21
  $region20: #{conditional_gan_forward.1} parent=0 // pred_region
    _
  $region21: #{conditional_gan_forward.1} parent=0 // pred_fallthru
    _
  // Predicated region
  $region22: #{conditional_gan_forward.1} parent=0 // pred_check
    _
  $region23: #{conditional_gan_forward.1} parent=0 // pred_check_branch
    %23 = sbr.rel (0) target = $region25
  $region24: #{conditional_gan_forward.1} parent=0 // pred_region
    _
  $region25: #{conditional_gan_forward.1} parent=0 // pred_fallthru
    _
  // Predicated region
  $region26: #{conditional_gan_forward.1} parent=0 // pred_check
    _
  $region27: #{conditional_gan_forward.1} parent=0 // pred_check_branch
    %25 = sbr.rel (0) target = $region29
  $region28: #{conditional_gan_forward.1} parent=0 // pred_region
    _
  $region29: #{conditional_gan_forward.1} parent=0 // pred_fallthru
    _
  %v27 = vld [vmem:[%s0] sm:$0xf]
  %v28 = vld [vmem:[%s1] sm:$0xff]
  %v29 = vld [vmem:[%s1 + $0x8] sm:$0xff]
  %v30 = vld [vmem:[%s1 + $0x10] sm:$0xff]
  %v31 = vld [vmem:[%s1 + $0x18] sm:$0xff]
  %v32 = vld [vmem:[%s1 + $0x20] sm:$0xff]
  %v33 = vld [vmem:[%s1 + $0x28] sm:$0xff]
  %v34 = vld [vmem:[%s1 + $0x30] sm:$0xff]
  %v35 = vld [vmem:[%s1 + $0x38] sm:$0xff]
  %v36 = vld [vmem:[%s1 + $0x40] sm:$0xff]
  %v37 = vld [vmem:[%s1 + $0x48] sm:$0xff]
  %v38 = vld [vmem:[%s1 + $0x50] sm:$0xff]
  %v39 = vld [vmem:[%s1 + $0x58] sm:$0xff]
  %v40 = vld [vmem:[%s1 + $0x60] sm:$0xff]
  %v41 = vld [vmem:[%s1 + $0x68] sm:$0xff]
  %v42 = vld [vmem:[%s1 + $0x70] sm:$0xff]
  %v43 = vld [vmem:[%s1 + $0x78] sm:$0xff]
  %v44 = vld [vmem:[%s2] sm:$0x3]
  %v46 = vlaneseq
  %v47 = vshrl.u32 %v46, 7
  %v48 = vsub.s32 0, %v47
  %v49 = vrot.slane %v44, %v48
  %v50 = vlaneseq
  %v51 = vshrl.u32 %v50, 7
  %v52 = vsub.s32 1, %v51
  %v53 = vrot.slane %v44, %v52
  %v72 = vunpack.c.l.b16 %v28
  %v73 = vunpack.c.h.b16 %v28
  %v74 = vunpack.c.l.b16 %v29
  %v75 = vunpack.c.h.b16 %v29
  %v76 = vunpack.c.l.b16 %v30
  %v77 = vunpack.c.h.b16 %v30
  %v78 = vunpack.c.l.b16 %v31
  %v79 = vunpack.c.h.b16 %v31
  %v80 = vunpack.c.l.b16 %v32
  %v81 = vunpack.c.h.b16 %v32
  %v82 = vunpack.c.l.b16 %v33
  %v83 = vunpack.c.h.b16 %v33
  %v84 = vunpack.c.l.b16 %v34
  %v85 = vunpack.c.h.b16 %v34
  %v86 = vunpack.c.l.b16 %v35
  %v87 = vunpack.c.h.b16 %v35
  %v88 = vunpack.c.l.b16 %v36
  %v89 = vunpack.c.h.b16 %v36
  %v90 = vunpack.c.l.b16 %v37
  %v91 = vunpack.c.h.b16 %v37
  %v92 = vunpack.c.l.b16 %v38
  %v93 = vunpack.c.h.b16 %v38
  %v94 = vunpack.c.l.b16 %v39
  %v95 = vunpack.c.h.b16 %v39
  %v96 = vunpack.c.l.b16 %v40
  %v97 = vunpack.c.h.b16 %v40
  %v98 = vunpack.c.l.b16 %v41
  %v99 = vunpack.c.h.b16 %v41
  %v100 = vunpack.c.l.b16 %v42
  %v101 = vunpack.c.h.b16 %v42
  %v102 = vunpack.c.l.b16 %v43
  %v103 = vunpack.c.h.b16 %v43
  %v104 = vpack.c.b16 %v74, %v72
  %v105 = vpack.c.b16 %v75, %v73
  %v106 = vpack.c.b16 %v78, %v76
  %v107 = vpack.c.b16 %v79, %v77
  %v108 = vpack.c.b16 %v82, %v80
  %v109 = vpack.c.b16 %v83, %v81
  %v110 = vpack.c.b16 %v86, %v84
  %v111 = vpack.c.b16 %v87, %v85
  %v112 = vpack.c.b16 %v90, %v88
  %v113 = vpack.c.b16 %v91, %v89
  %v114 = vpack.c.b16 %v94, %v92
  %v115 = vpack.c.b16 %v95, %v93
  %v116 = vpack.c.b16 %v98, %v96
  %v117 = vpack.c.b16 %v99, %v97
  %v118 = vpack.c.b16 %v102, %v100
  %v119 = vpack.c.b16 %v103, %v101
  %136 = vmatprep.subr.bf16.mxu0 %v105
  %137 = vmatpush1.bf16.msra.mxu0 %v104
  %138 = vmatprep.subr.bf16.mxu0 %v107
  %139 = vmatpush1.bf16.msra.mxu0 %v106
  %140 = vmatprep.subr.bf16.mxu0 %v109
  %141 = vmatpush1.bf16.msra.mxu0 %v108
  %142 = vmatprep.subr.bf16.mxu0 %v111
  %143 = vmatpush1.bf16.msra.mxu0 %v110
  %144 = vmatprep.subr.bf16.mxu0 %v113
  %145 = vmatpush1.bf16.msra.mxu0 %v112
  %146 = vmatprep.subr.bf16.mxu0 %v115
  %147 = vmatpush1.bf16.msra.mxu0 %v114
  %148 = vmatprep.subr.bf16.mxu0 %v117
  %149 = vmatpush1.bf16.msra.mxu0 %v116
  %150 = vmatprep.subr.bf16.mxu0 %v119
  %151 = vmatpush1.bf16.msra.mxu0 %v118
  %152 = vmatprep.subr.bf16.mxu0 0
  %153 = vmatpush1.bf16.msra.mxu0 0
  %154 = vmatprep.subr.bf16.mxu0 0
  %155 = vmatpush1.bf16.msra.mxu0 0
  %156 = vmatprep.subr.bf16.mxu0 0
  %157 = vmatpush1.bf16.msra.mxu0 0
  %158 = vmatprep.subr.bf16.mxu0 0
  %159 = vmatpush1.bf16.msra.mxu0 0
  %160 = vmatprep.subr.bf16.mxu0 0
  %161 = vmatpush1.bf16.msra.mxu0 0
  %162 = vmatprep.subr.bf16.mxu0 0
  %163 = vmatpush1.bf16.msra.mxu0 0
  %164 = vmatprep.subr.bf16.mxu0 0
  %165 = vmatpush1.bf16.msra.mxu0 0
  %166 = vmatprep.subr.bf16.mxu0 0
  %167 = vmatpush1.bf16.msra.mxu0 0
  %168 = vmatprep.mubr.bf16.mxu0 0
  %169 = vmatmul.mubr.bf16.gmra.mrb[0].mxu0 %v27
  %v170 = vpop.f32.mrb[0].mxu0
  %v171 = vadd.f32 %v49, %v170
  %v172 = vpop.f32.mrb[0].mxu0
  %v173 = vadd.f32 %v53, %v172
  %v174 = vpop.f32.mrb[0].mxu0
  %v175 = vpop.f32.mrb[0].mxu0
  %176 = vdwg.mxu0
  %v177 = vmax.f32 %v171, 0.0
  %v178 = vmax.f32 %v173, 0.0
  %v179 = vpack.c.bf16 %v177, %v177
  %v180 = vpack.c.bf16 %v178, %v178
  %v181 = vld [vmem:[%s3] sm:$0xff]
  %v182 = vld [vmem:[%s3 + $0x8] sm:$0xff]
  %v183 = vld [vmem:[%s3 + $0x10] sm:$0xff]
  %v184 = vld [vmem:[%s3 + $0x18] sm:$0xff]
  %v185 = vld [vmem:[%s3 + $0x20] sm:$0xff]
  %v186 = vld [vmem:[%s3 + $0x28] sm:$0xff]
  %v187 = vld [vmem:[%s3 + $0x30] sm:$0xff]
  %v188 = vld [vmem:[%s3 + $0x38] sm:$0xff]
  %v189 = vld [vmem:[%s3 + $0x40] sm:$0xff]
  %v190 = vld [vmem:[%s3 + $0x48] sm:$0xff]
  %v191 = vld [vmem:[%s3 + $0x50] sm:$0xff]
  %v192 = vld [vmem:[%s3 + $0x58] sm:$0xff]
  %v193 = vld [vmem:[%s3 + $0x60] sm:$0xff]
  %v194 = vld [vmem:[%s3 + $0x68] sm:$0xff]
  %v195 = vld [vmem:[%s3 + $0x70] sm:$0xff]
  %v196 = vld [vmem:[%s3 + $0x78] sm:$0xff]
  %v197 = vld [vmem:[%s3 + $0x80] sm:$0xff]
  %v198 = vld [vmem:[%s3 + $0x88] sm:$0xff]
  %v199 = vld [vmem:[%s3 + $0x90] sm:$0xff]
  %v200 = vld [vmem:[%s3 + $0x98] sm:$0xff]
  %v201 = vld [vmem:[%s3 + $0xa0] sm:$0xff]
  %v202 = vld [vmem:[%s3 + $0xa8] sm:$0xff]
  %v203 = vld [vmem:[%s3 + $0xb0] sm:$0xff]
  %v204 = vld [vmem:[%s3 + $0xb8] sm:$0xff]
  %v205 = vld [vmem:[%s3 + $0xc0] sm:$0xff]
  %v206 = vld [vmem:[%s3 + $0xc8] sm:$0xff]
  %v207 = vld [vmem:[%s3 + $0xd0] sm:$0xff]
  %v208 = vld [vmem:[%s3 + $0xd8] sm:$0xff]
  %v209 = vld [vmem:[%s3 + $0xe0] sm:$0xff]
  %v210 = vld [vmem:[%s3 + $0xe8] sm:$0xff]
  %v211 = vld [vmem:[%s3 + $0xf0] sm:$0xff]
  %v212 = vld [vmem:[%s3 + $0xf8] sm:$0xff]
  %v213 = vld [vmem:[%s3 + $0x100] sm:$0xff]
  %v214 = vld [vmem:[%s3 + $0x108] sm:$0xff]
  %v215 = vld [vmem:[%s3 + $0x110] sm:$0xff]
  %v216 = vld [vmem:[%s3 + $0x118] sm:$0xff]
  %v217 = vld [vmem:[%s3 + $0x120] sm:$0xff]
  %v218 = vld [vmem:[%s3 + $0x128] sm:$0xff]
  %v219 = vld [vmem:[%s3 + $0x130] sm:$0xff]
  %v220 = vld [vmem:[%s3 + $0x138] sm:$0xff]
  %v221 = vld [vmem:[%s3 + $0x140] sm:$0xff]
  %v222 = vld [vmem:[%s3 + $0x148] sm:$0xff]
  %v223 = vld [vmem:[%s3 + $0x150] sm:$0xff]
  %v224 = vld [vmem:[%s3 + $0x158] sm:$0xff]
  %v225 = vld [vmem:[%s3 + $0x160] sm:$0xff]
  %v226 = vld [vmem:[%s3 + $0x168] sm:$0xff]
  %v227 = vld [vmem:[%s3 + $0x170] sm:$0xff]
  %v228 = vld [vmem:[%s3 + $0x178] sm:$0xff]
  %v229 = vld [vmem:[%s3 + $0x180] sm:$0xff]
  %v230 = vld [vmem:[%s3 + $0x188] sm:$0xff]
  %v231 = vld [vmem:[%s3 + $0x190] sm:$0xff]
  %v232 = vld [vmem:[%s3 + $0x198] sm:$0xff]
  %v233 = vld [vmem:[%s3 + $0x1a0] sm:$0xff]
  %v234 = vld [vmem:[%s3 + $0x1a8] sm:$0xff]
  %v235 = vld [vmem:[%s3 + $0x1b0] sm:$0xff]
  %v236 = vld [vmem:[%s3 + $0x1b8] sm:$0xff]
  %v237 = vld [vmem:[%s3 + $0x1c0] sm:$0xff]
  %v238 = vld [vmem:[%s3 + $0x1c8] sm:$0xff]
  %v239 = vld [vmem:[%s3 + $0x1d0] sm:$0xff]
  %v240 = vld [vmem:[%s3 + $0x1d8] sm:$0xff]
  %v241 = vld [vmem:[%s3 + $0x1e0] sm:$0xff]
  %v242 = vld [vmem:[%s3 + $0x1e8] sm:$0xff]
  %v243 = vld [vmem:[%s3 + $0x1f0] sm:$0xff]
  %v244 = vld [vmem:[%s3 + $0x1f8] sm:$0xff]
  %v245 = vld [vmem:[%s4] sm:$0xf]
  %v247 = vlaneseq
  %v248 = vshrl.u32 %v247, 7
  %v249 = vsub.s32 0, %v248
  %v250 = vrot.slane %v245, %v249
  %v251 = vlaneseq
  %v252 = vshrl.u32 %v251, 7
  %v253 = vsub.s32 1, %v252
  %v254 = vrot.slane %v245, %v253
  %v255 = vlaneseq
  %v256 = vshrl.u32 %v255, 7
  %v257 = vsub.s32 2, %v256
  %v258 = vrot.slane %v245, %v257
  %v259 = vlaneseq
  %v260 = vshrl.u32 %v259, 7
  %v261 = vsub.s32 3, %v260
  %v262 = vrot.slane %v245, %v261
  %v331 = vunpack.c.l.b16 %v181
  %v332 = vunpack.c.h.b16 %v181
  %v333 = vunpack.c.l.b16 %v182
  %v334 = vunpack.c.h.b16 %v182
  %v335 = vunpack.c.l.b16 %v183
  %v336 = vunpack.c.h.b16 %v183
  %v337 = vunpack.c.l.b16 %v184
  %v338 = vunpack.c.h.b16 %v184
  %v339 = vunpack.c.l.b16 %v185
  %v340 = vunpack.c.h.b16 %v185
  %v341 = vunpack.c.l.b16 %v186
  %v342 = vunpack.c.h.b16 %v186
  %v343 = vunpack.c.l.b16 %v187
  %v344 = vunpack.c.h.b16 %v187
  %v345 = vunpack.c.l.b16 %v188
  %v346 = vunpack.c.h.b16 %v188
  %v347 = vunpack.c.l.b16 %v189
  %v348 = vunpack.c.h.b16 %v189
  %v349 = vunpack.c.l.b16 %v190
  %v350 = vunpack.c.h.b16 %v190
  %v351 = vunpack.c.l.b16 %v191
  %v352 = vunpack.c.h.b16 %v191
  %v353 = vunpack.c.l.b16 %v192
  %v354 = vunpack.c.h.b16 %v192
  %v355 = vunpack.c.l.b16 %v193
  %v356 = vunpack.c.h.b16 %v193
  %v357 = vunpack.c.l.b16 %v194
  %v358 = vunpack.c.h.b16 %v194
  %v359 = vunpack.c.l.b16 %v195
  %v360 = vunpack.c.h.b16 %v195
  %v361 = vunpack.c.l.b16 %v196
  %v362 = vunpack.c.h.b16 %v196
  %v363 = vunpack.c.l.b16 %v197
  %v364 = vunpack.c.h.b16 %v197
  %v365 = vunpack.c.l.b16 %v198
  %v366 = vunpack.c.h.b16 %v198
  %v367 = vunpack.c.l.b16 %v199
  %v368 = vunpack.c.h.b16 %v199
  %v369 = vunpack.c.l.b16 %v200
  %v370 = vunpack.c.h.b16 %v200
  %v371 = vunpack.c.l.b16 %v201
  %v372 = vunpack.c.h.b16 %v201
  %v373 = vunpack.c.l.b16 %v202
  %v374 = vunpack.c.h.b16 %v202
  %v375 = vunpack.c.l.b16 %v203
  %v376 = vunpack.c.h.b16 %v203
  %v377 = vunpack.c.l.b16 %v204
  %v378 = vunpack.c.h.b16 %v204
  %v379 = vunpack.c.l.b16 %v205
  %v380 = vunpack.c.h.b16 %v205
  %v381 = vunpack.c.l.b16 %v206
  %v382 = vunpack.c.h.b16 %v206
  %v383 = vunpack.c.l.b16 %v207
  %v384 = vunpack.c.h.b16 %v207
  %v385 = vunpack.c.l.b16 %v208
  %v386 = vunpack.c.h.b16 %v208
  %v387 = vunpack.c.l.b16 %v209
  %v388 = vunpack.c.h.b16 %v209
  %v389 = vunpack.c.l.b16 %v210
  %v390 = vunpack.c.h.b16 %v210
  %v391 = vunpack.c.l.b16 %v211
  %v392 = vunpack.c.h.b16 %v211
  %v393 = vunpack.c.l.b16 %v212
  %v394 = vunpack.c.h.b16 %v212
  %v395 = vunpack.c.l.b16 %v213
  %v396 = vunpack.c.h.b16 %v213
  %v397 = vunpack.c.l.b16 %v214
  %v398 = vunpack.c.h.b16 %v214
  %v399 = vunpack.c.l.b16 %v215
  %v400 = vunpack.c.h.b16 %v215
  %v401 = vunpack.c.l.b16 %v216
  %v402 = vunpack.c.h.b16 %v216
  %v403 = vunpack.c.l.b16 %v217
  %v404 = vunpack.c.h.b16 %v217
  %v405 = vunpack.c.l.b16 %v218
  %v406 = vunpack.c.h.b16 %v218
  %v407 = vunpack.c.l.b16 %v219
  %v408 = vunpack.c.h.b16 %v219
  %v409 = vunpack.c.l.b16 %v220
  %v410 = vunpack.c.h.b16 %v220
  %v411 = vunpack.c.l.b16 %v221
  %v412 = vunpack.c.h.b16 %v221
  %v413 = vunpack.c.l.b16 %v222
  %v414 = vunpack.c.h.b16 %v222
  %v415 = vunpack.c.l.b16 %v223
  %v416 = vunpack.c.h.b16 %v223
  %v417 = vunpack.c.l.b16 %v224
  %v418 = vunpack.c.h.b16 %v224
  %v419 = vunpack.c.l.b16 %v225
  %v420 = vunpack.c.h.b16 %v225
  %v421 = vunpack.c.l.b16 %v226
  %v422 = vunpack.c.h.b16 %v226
  %v423 = vunpack.c.l.b16 %v227
  %v424 = vunpack.c.h.b16 %v227
  %v425 = vunpack.c.l.b16 %v228
  %v426 = vunpack.c.h.b16 %v228
  %v427 = vunpack.c.l.b16 %v229
  %v428 = vunpack.c.h.b16 %v229
  %v429 = vunpack.c.l.b16 %v230
  %v430 = vunpack.c.h.b16 %v230
  %v431 = vunpack.c.l.b16 %v231
  %v432 = vunpack.c.h.b16 %v231
  %v433 = vunpack.c.l.b16 %v232
  %v434 = vunpack.c.h.b16 %v232
  %v435 = vunpack.c.l.b16 %v233
  %v436 = vunpack.c.h.b16 %v233
  %v437 = vunpack.c.l.b16 %v234
  %v438 = vunpack.c.h.b16 %v234
  %v439 = vunpack.c.l.b16 %v235
  %v440 = vunpack.c.h.b16 %v235
  %v441 = vunpack.c.l.b16 %v236
  %v442 = vunpack.c.h.b16 %v236
  %v443 = vunpack.c.l.b16 %v237
  %v444 = vunpack.c.h.b16 %v237
  %v445 = vunpack.c.l.b16 %v238
  %v446 = vunpack.c.h.b16 %v238
  %v447 = vunpack.c.l.b16 %v239
  %v448 = vunpack.c.h.b16 %v239
  %v449 = vunpack.c.l.b16 %v240
  %v450 = vunpack.c.h.b16 %v240
  %v451 = vunpack.c.l.b16 %v241
  %v452 = vunpack.c.h.b16 %v241
  %v453 = vunpack.c.l.b16 %v242
  %v454 = vunpack.c.h.b16 %v242
  %v455 = vunpack.c.l.b16 %v243
  %v456 = vunpack.c.h.b16 %v243
  %v457 = vunpack.c.l.b16 %v244
  %v458 = vunpack.c.h.b16 %v244
  %v459 = vpack.c.b16 %v335, %v331
  %v460 = vpack.c.b16 %v336, %v332
  %v461 = vpack.c.b16 %v337, %v333
  %v462 = vpack.c.b16 %v338, %v334
  %v463 = vpack.c.b16 %v343, %v339
  %v464 = vpack.c.b16 %v344, %v340
  %v465 = vpack.c.b16 %v345, %v341
  %v466 = vpack.c.b16 %v346, %v342
  %v467 = vpack.c.b16 %v351, %v347
  %v468 = vpack.c.b16 %v352, %v348
  %v469 = vpack.c.b16 %v353, %v349
  %v470 = vpack.c.b16 %v354, %v350
  %v471 = vpack.c.b16 %v359, %v355
  %v472 = vpack.c.b16 %v360, %v356
  %v473 = vpack.c.b16 %v361, %v357
  %v474 = vpack.c.b16 %v362, %v358
  %v475 = vpack.c.b16 %v367, %v363
  %v476 = vpack.c.b16 %v368, %v364
  %v477 = vpack.c.b16 %v369, %v365
  %v478 = vpack.c.b16 %v370, %v366
  %v479 = vpack.c.b16 %v375, %v371
  %v480 = vpack.c.b16 %v376, %v372
  %v481 = vpack.c.b16 %v377, %v373
  %v482 = vpack.c.b16 %v378, %v374
  %v483 = vpack.c.b16 %v383, %v379
  %v484 = vpack.c.b16 %v384, %v380
  %v485 = vpack.c.b16 %v385, %v381
  %v486 = vpack.c.b16 %v386, %v382
  %v487 = vpack.c.b16 %v391, %v387
  %v488 = vpack.c.b16 %v392, %v388
  %v489 = vpack.c.b16 %v393, %v389
  %v490 = vpack.c.b16 %v394, %v390
  %v491 = vpack.c.b16 %v399, %v395
  %v492 = vpack.c.b16 %v400, %v396
  %v493 = vpack.c.b16 %v401, %v397
  %v494 = vpack.c.b16 %v402, %v398
  %v495 = vpack.c.b16 %v407, %v403
  %v496 = vpack.c.b16 %v408, %v404
  %v497 = vpack.c.b16 %v409, %v405
  %v498 = vpack.c.b16 %v410, %v406
  %v499 = vpack.c.b16 %v415, %v411
  %v500 = vpack.c.b16 %v416, %v412
  %v501 = vpack.c.b16 %v417, %v413
  %v502 = vpack.c.b16 %v418, %v414
  %v503 = vpack.c.b16 %v423, %v419
  %v504 = vpack.c.b16 %v424, %v420
  %v505 = vpack.c.b16 %v425, %v421
  %v506 = vpack.c.b16 %v426, %v422
  %v507 = vpack.c.b16 %v431, %v427
  %v508 = vpack.c.b16 %v432, %v428
  %v509 = vpack.c.b16 %v433, %v429
  %v510 = vpack.c.b16 %v434, %v430
  %v511 = vpack.c.b16 %v439, %v435
  %v512 = vpack.c.b16 %v440, %v436
  %v513 = vpack.c.b16 %v441, %v437
  %v514 = vpack.c.b16 %v442, %v438
  %v515 = vpack.c.b16 %v447, %v443
  %v516 = vpack.c.b16 %v448, %v444
  %v517 = vpack.c.b16 %v449, %v445
  %v518 = vpack.c.b16 %v450, %v446
  %v519 = vpack.c.b16 %v455, %v451
  %v520 = vpack.c.b16 %v456, %v452
  %v521 = vpack.c.b16 %v457, %v453
  %v522 = vpack.c.b16 %v458, %v454
  %587 = vmatprep.subr.bf16.mxu0 %v460
  %588 = vmatpush1.bf16.msra.mxu0 %v459
  %589 = vmatprep.subr.bf16.mxu0 %v464
  %590 = vmatpush1.bf16.msra.mxu0 %v463
  %591 = vmatprep.subr.bf16.mxu0 %v468
  %592 = vmatpush1.bf16.msra.mxu0 %v467
  %593 = vmatprep.subr.bf16.mxu0 %v472
  %594 = vmatpush1.bf16.msra.mxu0 %v471
  %595 = vmatprep.subr.bf16.mxu0 %v476
  %596 = vmatpush1.bf16.msra.mxu0 %v475
  %597 = vmatprep.subr.bf16.mxu0 %v480
  %598 = vmatpush1.bf16.msra.mxu0 %v479
  %599 = vmatprep.subr.bf16.mxu0 %v484
  %600 = vmatpush1.bf16.msra.mxu0 %v483
  %601 = vmatprep.subr.bf16.mxu0 %v488
  %602 = vmatpush1.bf16.msra.mxu0 %v487
  %603 = vmatprep.subr.bf16.mxu0 %v492
  %604 = vmatpush1.bf16.msra.mxu0 %v491
  %605 = vmatprep.subr.bf16.mxu0 %v496
  %606 = vmatpush1.bf16.msra.mxu0 %v495
  %607 = vmatprep.subr.bf16.mxu0 %v500
  %608 = vmatpush1.bf16.msra.mxu0 %v499
  %609 = vmatprep.subr.bf16.mxu0 %v504
  %610 = vmatpush1.bf16.msra.mxu0 %v503
  %611 = vmatprep.subr.bf16.mxu0 %v508
  %612 = vmatpush1.bf16.msra.mxu0 %v507
  %613 = vmatprep.subr.bf16.mxu0 %v512
  %614 = vmatpush1.bf16.msra.mxu0 %v511
  %615 = vmatprep.subr.bf16.mxu0 %v516
  %616 = vmatpush1.bf16.msra.mxu0 %v515
  %617 = vmatprep.subr.bf16.mxu0 %v520
  %618 = vmatpush1.bf16.msra.mxu0 %v519
  %619 = vmatprep.mubr.bf16.mxu0 %v180
  %620 = vmatmul.mubr.bf16.gmra.mrb[0].mxu0 %v179
  %v621 = vpop.f32.mrb[0].mxu0
  %v622 = vadd.f32 %v250, %v621
  %v623 = vpop.f32.mrb[0].mxu0
  %v624 = vadd.f32 %v254, %v623
  %v625 = vpop.f32.mrb[0].mxu0
  %v626 = vpop.f32.mrb[0].mxu0
  %627 = vdwg.mxu0
  %628 = vmatprep.subr.bf16.mxu0 %v462
  %629 = vmatpush1.bf16.msra.mxu0 %v461
  %630 = vmatprep.subr.bf16.mxu0 %v466
  %631 = vmatpush1.bf16.msra.mxu0 %v465
  %632 = vmatprep.subr.bf16.mxu0 %v470
  %633 = vmatpush1.bf16.msra.mxu0 %v469
  %634 = vmatprep.subr.bf16.mxu0 %v474
  %635 = vmatpush1.bf16.msra.mxu0 %v473
  %636 = vmatprep.subr.bf16.mxu0 %v478
  %637 = vmatpush1.bf16.msra.mxu0 %v477
  %638 = vmatprep.subr.bf16.mxu0 %v482
  %639 = vmatpush1.bf16.msra.mxu0 %v481
  %640 = vmatprep.subr.bf16.mxu0 %v486
  %641 = vmatpush1.bf16.msra.mxu0 %v485
  %642 = vmatprep.subr.bf16.mxu0 %v490
  %643 = vmatpush1.bf16.msra.mxu0 %v489
  %644 = vmatprep.subr.bf16.mxu0 %v494
  %645 = vmatpush1.bf16.msra.mxu0 %v493
  %646 = vmatprep.subr.bf16.mxu0 %v498
  %647 = vmatpush1.bf16.msra.mxu0 %v497
  %648 = vmatprep.subr.bf16.mxu0 %v502
  %649 = vmatpush1.bf16.msra.mxu0 %v501
  %650 = vmatprep.subr.bf16.mxu0 %v506
  %651 = vmatpush1.bf16.msra.mxu0 %v505
  %652 = vmatprep.subr.bf16.mxu0 %v510
  %653 = vmatpush1.bf16.msra.mxu0 %v509
  %654 = vmatprep.subr.bf16.mxu0 %v514
  %655 = vmatpush1.bf16.msra.mxu0 %v513
  %656 = vmatprep.subr.bf16.mxu0 %v518
  %657 = vmatpush1.bf16.msra.mxu0 %v517
  %658 = vmatprep.subr.bf16.mxu0 %v522
  %659 = vmatpush1.bf16.msra.mxu0 %v521
  %660 = vmatprep.mubr.bf16.mxu0 %v180
  %661 = vmatmul.mubr.bf16.gmra.mrb[0].mxu0 %v179
  %v662 = vpop.f32.mrb[0].mxu0
  %v663 = vadd.f32 %v258, %v662
  %v664 = vpop.f32.mrb[0].mxu0
  %v665 = vadd.f32 %v262, %v664
  %v666 = vpop.f32.mrb[0].mxu0
  %v667 = vpop.f32.mrb[0].mxu0
  %668 = vdwg.mxu0
  %v669 = vmax.f32 %v622, 0.0
  %v670 = vmax.f32 %v624, 0.0
  %v671 = vmax.f32 %v663, 0.0
  %v672 = vmax.f32 %v665, 0.0
  %v673 = vpack.c.bf16 %v669, %v669
  %v674 = vpack.c.bf16 %v670, %v670
  %v675 = vpack.c.bf16 %v671, %v671
  %v676 = vpack.c.bf16 %v672, %v672
  %v677 = vld [vmem:[%s5] sm:$0xff]
  %v678 = vld [vmem:[%s5 + $0x8] sm:$0xff]
  %v679 = vld [vmem:[%s5 + $0x10] sm:$0xf]
  %v680 = vld [vmem:[%s5 + $0x14] sm:$0xff]
  %v681 = vld [vmem:[%s5 + $0x1c] sm:$0xff]
  %v682 = vld [vmem:[%s5 + $0x24] sm:$0xf]
  %v683 = vld [vmem:[%s5 + $0x28] sm:$0xff]
  %v684 = vld [vmem:[%s5 + $0x30] sm:$0xff]
  %v685 = vld [vmem:[%s5 + $0x38] sm:$0xf]
  %v686 = vld [vmem:[%s5 + $0x3c] sm:$0xff]
  %v687 = vld [vmem:[%s5 + $0x44] sm:$0xff]
  %v688 = vld [vmem:[%s5 + $0x4c] sm:$0xf]
  %v689 = vld [vmem:[%s5 + $0x50] sm:$0xff]
  %v690 = vld [vmem:[%s5 + $0x58] sm:$0xff]
  %v691 = vld [vmem:[%s5 + $0x60] sm:$0xf]
  %v692 = vld [vmem:[%s5 + $0x64] sm:$0xff]
  %v693 = vld [vmem:[%s5 + $0x6c] sm:$0xff]
  %v694 = vld [vmem:[%s5 + $0x74] sm:$0xf]
  %v695 = vld [vmem:[%s5 + $0x78] sm:$0xff]
  %v696 = vld [vmem:[%s5 + $0x80] sm:$0xff]
  %v697 = vld [vmem:[%s5 + $0x88] sm:$0xf]
  %v698 = vld [vmem:[%s5 + $0x8c] sm:$0xff]
  %v699 = vld [vmem:[%s5 + $0x94] sm:$0xff]
  %v700 = vld [vmem:[%s5 + $0x9c] sm:$0xf]
  %v701 = vld [vmem:[%s5 + $0xa0] sm:$0xff]
  %v702 = vld [vmem:[%s5 + $0xa8] sm:$0xff]
  %v703 = vld [vmem:[%s5 + $0xb0] sm:$0xf]
  %v704 = vld [vmem:[%s5 + $0xb4] sm:$0xff]
  %v705 = vld [vmem:[%s5 + $0xbc] sm:$0xff]
  %v706 = vld [vmem:[%s5 + $0xc4] sm:$0xf]
  %v707 = vld [vmem:[%s5 + $0xc8] sm:$0xff]
  %v708 = vld [vmem:[%s5 + $0xd0] sm:$0xff]
  %v709 = vld [vmem:[%s5 + $0xd8] sm:$0xf]
  %v710 = vld [vmem:[%s5 + $0xdc] sm:$0xff]
  %v711 = vld [vmem:[%s5 + $0xe4] sm:$0xff]
  %v712 = vld [vmem:[%s5 + $0xec] sm:$0xf]
  %v713 = vld [vmem:[%s5 + $0xf0] sm:$0xff]
  %v714 = vld [vmem:[%s5 + $0xf8] sm:$0xff]
  %v715 = vld [vmem:[%s5 + $0x100] sm:$0xf]
  %v716 = vld [vmem:[%s5 + $0x104] sm:$0xff]
  %v717 = vld [vmem:[%s5 + $0x10c] sm:$0xff]
  %v718 = vld [vmem:[%s5 + $0x114] sm:$0xf]
  %v719 = vld [vmem:[%s5 + $0x118] sm:$0xff]
  %v720 = vld [vmem:[%s5 + $0x120] sm:$0xff]
  %v721 = vld [vmem:[%s5 + $0x128] sm:$0xf]
  %v722 = vld [vmem:[%s5 + $0x12c] sm:$0xff]
  %v723 = vld [vmem:[%s5 + $0x134] sm:$0xff]
  %v724 = vld [vmem:[%s5 + $0x13c] sm:$0xf]
  %v725 = vld [vmem:[%s5 + $0x140] sm:$0xff]
  %v726 = vld [vmem:[%s5 + $0x148] sm:$0xff]
  %v727 = vld [vmem:[%s5 + $0x150] sm:$0xf]
  %v728 = vld [vmem:[%s5 + $0x154] sm:$0xff]
  %v729 = vld [vmem:[%s5 + $0x15c] sm:$0xff]
  %v730 = vld [vmem:[%s5 + $0x164] sm:$0xf]
  %v731 = vld [vmem:[%s5 + $0x168] sm:$0xff]
  %v732 = vld [vmem:[%s5 + $0x170] sm:$0xff]
  %v733 = vld [vmem:[%s5 + $0x178] sm:$0xf]
  %v734 = vld [vmem:[%s5 + $0x17c] sm:$0xff]
  %v735 = vld [vmem:[%s5 + $0x184] sm:$0xff]
  %v736 = vld [vmem:[%s5 + $0x18c] sm:$0xf]
  %v737 = vld [vmem:[%s5 + $0x190] sm:$0xff]
  %v738 = vld [vmem:[%s5 + $0x198] sm:$0xff]
  %v739 = vld [vmem:[%s5 + $0x1a0] sm:$0xf]
  %v740 = vld [vmem:[%s5 + $0x1a4] sm:$0xff]
  %v741 = vld [vmem:[%s5 + $0x1ac] sm:$0xff]
  %v742 = vld [vmem:[%s5 + $0x1b4] sm:$0xf]
  %v743 = vld [vmem:[%s5 + $0x1b8] sm:$0xff]
  %v744 = vld [vmem:[%s5 + $0x1c0] sm:$0xff]
  %v745 = vld [vmem:[%s5 + $0x1c8] sm:$0xf]
  %v746 = vld [vmem:[%s5 + $0x1cc] sm:$0xff]
  %v747 = vld [vmem:[%s5 + $0x1d4] sm:$0xff]
  %v748 = vld [vmem:[%s5 + $0x1dc] sm:$0xf]
  %v749 = vld [vmem:[%s5 + $0x1e0] sm:$0xff]
  %v750 = vld [vmem:[%s5 + $0x1e8] sm:$0xff]
  %v751 = vld [vmem:[%s5 + $0x1f0] sm:$0xf]
  %v752 = vld [vmem:[%s5 + $0x1f4] sm:$0xff]
  %v753 = vld [vmem:[%s5 + $0x1fc] sm:$0xff]
  %v754 = vld [vmem:[%s5 + $0x204] sm:$0xf]
  %v755 = vld [vmem:[%s5 + $0x208] sm:$0xff]
  %v756 = vld [vmem:[%s5 + $0x210] sm:$0xff]
  %v757 = vld [vmem:[%s5 + $0x218] sm:$0xf]
  %v758 = vld [vmem:[%s5 + $0x21c] sm:$0xff]
  %v759 = vld [vmem:[%s5 + $0x224] sm:$0xff]
  %v760 = vld [vmem:[%s5 + $0x22c] sm:$0xf]
  %v761 = vld [vmem:[%s5 + $0x230] sm:$0xff]
  %v762 = vld [vmem:[%s5 + $0x238] sm:$0xff]
  %v763 = vld [vmem:[%s5 + $0x240] sm:$0xf]
  %v764 = vld [vmem:[%s5 + $0x244] sm:$0xff]
  %v765 = vld [vmem:[%s5 + $0x24c] sm:$0xff]
  %v766 = vld [vmem:[%s5 + $0x254] sm:$0xf]
  %v767 = vld [vmem:[%s5 + $0x258] sm:$0xff]
  %v768 = vld [vmem:[%s5 + $0x260] sm:$0xff]
  %v769 = vld [vmem:[%s5 + $0x268] sm:$0xf]
  %v770 = vld [vmem:[%s5 + $0x26c] sm:$0xff]
  %v771 = vld [vmem:[%s5 + $0x274] sm:$0xff]
  %v772 = vld [vmem:[%s5 + $0x27c] sm:$0xf]
  %v773 = vld [vmem:[%s5 + $0x280] sm:$0xff]
  %v774 = vld [vmem:[%s5 + $0x288] sm:$0xff]
  %v775 = vld [vmem:[%s5 + $0x290] sm:$0xf]
  %v776 = vld [vmem:[%s5 + $0x294] sm:$0xff]
  %v777 = vld [vmem:[%s5 + $0x29c] sm:$0xff]
  %v778 = vld [vmem:[%s5 + $0x2a4] sm:$0xf]
  %v779 = vld [vmem:[%s5 + $0x2a8] sm:$0xff]
  %v780 = vld [vmem:[%s5 + $0x2b0] sm:$0xff]
  %v781 = vld [vmem:[%s5 + $0x2b8] sm:$0xf]
  %v782 = vld [vmem:[%s5 + $0x2bc] sm:$0xff]
  %v783 = vld [vmem:[%s5 + $0x2c4] sm:$0xff]
  %v784 = vld [vmem:[%s5 + $0x2cc] sm:$0xf]
  %v785 = vld [vmem:[%s5 + $0x2d0] sm:$0xff]
  %v786 = vld [vmem:[%s5 + $0x2d8] sm:$0xff]
  %v787 = vld [vmem:[%s5 + $0x2e0] sm:$0xf]
  %v788 = vld [vmem:[%s5 + $0x2e4] sm:$0xff]
  %v789 = vld [vmem:[%s5 + $0x2ec] sm:$0xff]
  %v790 = vld [vmem:[%s5 + $0x2f4] sm:$0xf]
  %v791 = vld [vmem:[%s5 + $0x2f8] sm:$0xff]
  %v792 = vld [vmem:[%s5 + $0x300] sm:$0xff]
  %v793 = vld [vmem:[%s5 + $0x308] sm:$0xf]
  %v794 = vld [vmem:[%s5 + $0x30c] sm:$0xff]
  %v795 = vld [vmem:[%s5 + $0x314] sm:$0xff]
  %v796 = vld [vmem:[%s5 + $0x31c] sm:$0xf]
  %v797 = vld [vmem:[%s5 + $0x320] sm:$0xff]
  %v798 = vld [vmem:[%s5 + $0x328] sm:$0xff]
  %v799 = vld [vmem:[%s5 + $0x330] sm:$0xf]
  %v800 = vld [vmem:[%s5 + $0x334] sm:$0xff]
  %v801 = vld [vmem:[%s5 + $0x33c] sm:$0xff]
  %v802 = vld [vmem:[%s5 + $0x344] sm:$0xf]
  %v803 = vld [vmem:[%s5 + $0x348] sm:$0xff]
  %v804 = vld [vmem:[%s5 + $0x350] sm:$0xff]
  %v805 = vld [vmem:[%s5 + $0x358] sm:$0xf]
  %v806 = vld [vmem:[%s5 + $0x35c] sm:$0xff]
  %v807 = vld [vmem:[%s5 + $0x364] sm:$0xff]
  %v808 = vld [vmem:[%s5 + $0x36c] sm:$0xf]
  %v809 = vld [vmem:[%s5 + $0x370] sm:$0xff]
  %v810 = vld [vmem:[%s5 + $0x378] sm:$0xff]
  %v811 = vld [vmem:[%s5 + $0x380] sm:$0xf]
  %v812 = vld [vmem:[%s5 + $0x384] sm:$0xff]
  %v813 = vld [vmem:[%s5 + $0x38c] sm:$0xff]
  %v814 = vld [vmem:[%s5 + $0x394] sm:$0xf]
  %v815 = vld [vmem:[%s5 + $0x398] sm:$0xff]
  %v816 = vld [vmem:[%s5 + $0x3a0] sm:$0xff]
  %v817 = vld [vmem:[%s5 + $0x3a8] sm:$0xf]
  %v818 = vld [vmem:[%s5 + $0x3ac] sm:$0xff]
  %v819 = vld [vmem:[%s5 + $0x3b4] sm:$0xff]
  %v820 = vld [vmem:[%s5 + $0x3bc] sm:$0xf]
  %v821 = vld [vmem:[%s5 + $0x3c0] sm:$0xff]
  %v822 = vld [vmem:[%s5 + $0x3c8] sm:$0xff]
  %v823 = vld [vmem:[%s5 + $0x3d0] sm:$0xf]
  %v824 = vld [vmem:[%s5 + $0x3d4] sm:$0xff]
  %v825 = vld [vmem:[%s5 + $0x3dc] sm:$0xff]
  %v826 = vld [vmem:[%s5 + $0x3e4] sm:$0xf]
  %v827 = vld [vmem:[%s5 + $0x3e8] sm:$0xff]
  %v828 = vld [vmem:[%s5 + $0x3f0] sm:$0xff]
  %v829 = vld [vmem:[%s5 + $0x3f8] sm:$0xf]
  %v830 = vld [vmem:[%s5 + $0x3fc] sm:$0xff]
  %v831 = vld [vmem:[%s5 + $0x404] sm:$0xff]
  %v832 = vld [vmem:[%s5 + $0x40c] sm:$0xf]
  %v833 = vld [vmem:[%s5 + $0x410] sm:$0xff]
  %v834 = vld [vmem:[%s5 + $0x418] sm:$0xff]
  %v835 = vld [vmem:[%s5 + $0x420] sm:$0xf]
  %v836 = vld [vmem:[%s5 + $0x424] sm:$0xff]
  %v837 = vld [vmem:[%s5 + $0x42c] sm:$0xff]
  %v838 = vld [vmem:[%s5 + $0x434] sm:$0xf]
  %v839 = vld [vmem:[%s5 + $0x438] sm:$0xff]
  %v840 = vld [vmem:[%s5 + $0x440] sm:$0xff]
  %v841 = vld [vmem:[%s5 + $0x448] sm:$0xf]
  %v842 = vld [vmem:[%s5 + $0x44c] sm:$0xff]
  %v843 = vld [vmem:[%s5 + $0x454] sm:$0xff]
  %v844 = vld [vmem:[%s5 + $0x45c] sm:$0xf]
  %v845 = vld [vmem:[%s5 + $0x460] sm:$0xff]
  %v846 = vld [vmem:[%s5 + $0x468] sm:$0xff]
  %v847 = vld [vmem:[%s5 + $0x470] sm:$0xf]
  %v848 = vld [vmem:[%s5 + $0x474] sm:$0xff]
  %v849 = vld [vmem:[%s5 + $0x47c] sm:$0xff]
  %v850 = vld [vmem:[%s5 + $0x484] sm:$0xf]
  %v851 = vld [vmem:[%s5 + $0x488] sm:$0xff]
  %v852 = vld [vmem:[%s5 + $0x490] sm:$0xff]
  %v853 = vld [vmem:[%s5 + $0x498] sm:$0xf]
  %v854 = vld [vmem:[%s5 + $0x49c] sm:$0xff]
  %v855 = vld [vmem:[%s5 + $0x4a4] sm:$0xff]
  %v856 = vld [vmem:[%s5 + $0x4ac] sm:$0xf]
  %v857 = vld [vmem:[%s5 + $0x4b0] sm:$0xff]
  %v858 = vld [vmem:[%s5 + $0x4b8] sm:$0xff]
  %v859 = vld [vmem:[%s5 + $0x4c0] sm:$0xf]
  %v860 = vld [vmem:[%s5 + $0x4c4] sm:$0xff]
  %v861 = vld [vmem:[%s5 + $0x4cc] sm:$0xff]
  %v862 = vld [vmem:[%s5 + $0x4d4] sm:$0xf]
  %v863 = vld [vmem:[%s5 + $0x4d8] sm:$0xff]
  %v864 = vld [vmem:[%s5 + $0x4e0] sm:$0xff]
  %v865 = vld [vmem:[%s5 + $0x4e8] sm:$0xf]
  %v866 = vld [vmem:[%s5 + $0x4ec] sm:$0xff]
  %v867 = vld [vmem:[%s5 + $0x4f4] sm:$0xff]
  %v868 = vld [vmem:[%s5 + $0x4fc] sm:$0xf]
  %v869 = vld [vmem:[%s6] sm:$0x1f]
  %v871 = vlaneseq
  %v872 = vshrl.u32 %v871, 7
  %v873 = vsub.s32 0, %v872
  %v874 = vrot.slane %v869, %v873
  %v875 = vlaneseq
  %v876 = vshrl.u32 %v875, 7
  %v877 = vsub.s32 1, %v876
  %v878 = vrot.slane %v869, %v877
  %v879 = vlaneseq
  %v880 = vshrl.u32 %v879, 7
  %v881 = vsub.s32 2, %v880
  %v882 = vrot.slane %v869, %v881
  %v883 = vlaneseq
  %v884 = vshrl.u32 %v883, 7
  %v885 = vsub.s32 3, %v884
  %v886 = vrot.slane %v869, %v885
  %v887 = vlaneseq
  %v888 = vshrl.u32 %v887, 7
  %v889 = vsub.s32 4, %v888
  %v890 = vrot.slane %v869, %v889
  %v1088 = vunpack.c.l.b16 %v677
  %v1089 = vunpack.c.h.b16 %v677
  %v1090 = vunpack.c.l.b16 %v678
  %v1091 = vunpack.c.h.b16 %v678
  %v1092 = vunpack.c.l.b16 %v679
  %v1093 = vunpack.c.l.b16 %v680
  %v1094 = vunpack.c.h.b16 %v680
  %v1095 = vunpack.c.l.b16 %v681
  %v1096 = vunpack.c.h.b16 %v681
  %v1097 = vunpack.c.l.b16 %v682
  %v1098 = vunpack.c.l.b16 %v683
  %v1099 = vunpack.c.h.b16 %v683
  %v1100 = vunpack.c.l.b16 %v684
  %v1101 = vunpack.c.h.b16 %v684
  %v1102 = vunpack.c.l.b16 %v685
  %v1103 = vunpack.c.l.b16 %v686
  %v1104 = vunpack.c.h.b16 %v686
  %v1105 = vunpack.c.l.b16 %v687
  %v1106 = vunpack.c.h.b16 %v687
  %v1107 = vunpack.c.l.b16 %v688
  %v1108 = vunpack.c.l.b16 %v689
  %v1109 = vunpack.c.h.b16 %v689
  %v1110 = vunpack.c.l.b16 %v690
  %v1111 = vunpack.c.h.b16 %v690
  %v1112 = vunpack.c.l.b16 %v691
  %v1113 = vunpack.c.l.b16 %v692
  %v1114 = vunpack.c.h.b16 %v692
  %v1115 = vunpack.c.l.b16 %v693
  %v1116 = vunpack.c.h.b16 %v693
  %v1117 = vunpack.c.l.b16 %v694
  %v1118 = vunpack.c.l.b16 %v695
  %v1119 = vunpack.c.h.b16 %v695
  %v1120 = vunpack.c.l.b16 %v696
  %v1121 = vunpack.c.h.b16 %v696
  %v1122 = vunpack.c.l.b16 %v697
  %v1123 = vunpack.c.l.b16 %v698
  %v1124 = vunpack.c.h.b16 %v698
  %v1125 = vunpack.c.l.b16 %v699
  %v1126 = vunpack.c.h.b16 %v699
  %v1127 = vunpack.c.l.b16 %v700
  %v1128 = vunpack.c.l.b16 %v701
  %v1129 = vunpack.c.h.b16 %v701
  %v1130 = vunpack.c.l.b16 %v702
  %v1131 = vunpack.c.h.b16 %v702
  %v1132 = vunpack.c.l.b16 %v703
  %v1133 = vunpack.c.l.b16 %v704
  %v1134 = vunpack.c.h.b16 %v704
  %v1135 = vunpack.c.l.b16 %v705
  %v1136 = vunpack.c.h.b16 %v705
  %v1137 = vunpack.c.l.b16 %v706
  %v1138 = vunpack.c.l.b16 %v707
  %v1139 = vunpack.c.h.b16 %v707
  %v1140 = vunpack.c.l.b16 %v708
  %v1141 = vunpack.c.h.b16 %v708
  %v1142 = vunpack.c.l.b16 %v709
  %v1143 = vunpack.c.l.b16 %v710
  %v1144 = vunpack.c.h.b16 %v710
  %v1145 = vunpack.c.l.b16 %v711
  %v1146 = vunpack.c.h.b16 %v711
  %v1147 = vunpack.c.l.b16 %v712
  %v1148 = vunpack.c.l.b16 %v713
  %v1149 = vunpack.c.h.b16 %v713
  %v1150 = vunpack.c.l.b16 %v714
  %v1151 = vunpack.c.h.b16 %v714
  %v1152 = vunpack.c.l.b16 %v715
  %v1153 = vunpack.c.l.b16 %v716
  %v1154 = vunpack.c.h.b16 %v716
  %v1155 = vunpack.c.l.b16 %v717
  %v1156 = vunpack.c.h.b16 %v717
  %v1157 = vunpack.c.l.b16 %v718
  %v1158 = vunpack.c.l.b16 %v719
  %v1159 = vunpack.c.h.b16 %v719
  %v1160 = vunpack.c.l.b16 %v720
  %v1161 = vunpack.c.h.b16 %v720
  %v1162 = vunpack.c.l.b16 %v721
  %v1163 = vunpack.c.l.b16 %v722
  %v1164 = vunpack.c.h.b16 %v722
  %v1165 = vunpack.c.l.b16 %v723
  %v1166 = vunpack.c.h.b16 %v723
  %v1167 = vunpack.c.l.b16 %v724
  %v1168 = vunpack.c.l.b16 %v725
  %v1169 = vunpack.c.h.b16 %v725
  %v1170 = vunpack.c.l.b16 %v726
  %v1171 = vunpack.c.h.b16 %v726
  %v1172 = vunpack.c.l.b16 %v727
  %v1173 = vunpack.c.l.b16 %v728
  %v1174 = vunpack.c.h.b16 %v728
  %v1175 = vunpack.c.l.b16 %v729
  %v1176 = vunpack.c.h.b16 %v729
  %v1177 = vunpack.c.l.b16 %v730
  %v1178 = vunpack.c.l.b16 %v731
  %v1179 = vunpack.c.h.b16 %v731
  %v1180 = vunpack.c.l.b16 %v732
  %v1181 = vunpack.c.h.b16 %v732
  %v1182 = vunpack.c.l.b16 %v733
  %v1183 = vunpack.c.l.b16 %v734
  %v1184 = vunpack.c.h.b16 %v734
  %v1185 = vunpack.c.l.b16 %v735
  %v1186 = vunpack.c.h.b16 %v735
  %v1187 = vunpack.c.l.b16 %v736
  %v1188 = vunpack.c.l.b16 %v737
  %v1189 = vunpack.c.h.b16 %v737
  %v1190 = vunpack.c.l.b16 %v738
  %v1191 = vunpack.c.h.b16 %v738
  %v1192 = vunpack.c.l.b16 %v739
  %v1193 = vunpack.c.l.b16 %v740
  %v1194 = vunpack.c.h.b16 %v740
  %v1195 = vunpack.c.l.b16 %v741
  %v1196 = vunpack.c.h.b16 %v741
  %v1197 = vunpack.c.l.b16 %v742
  %v1198 = vunpack.c.l.b16 %v743
  %v1199 = vunpack.c.h.b16 %v743
  %v1200 = vunpack.c.l.b16 %v744
  %v1201 = vunpack.c.h.b16 %v744
  %v1202 = vunpack.c.l.b16 %v745
  %v1203 = vunpack.c.l.b16 %v746
  %v1204 = vunpack.c.h.b16 %v746
  %v1205 = vunpack.c.l.b16 %v747
  %v1206 = vunpack.c.h.b16 %v747
  %v1207 = vunpack.c.l.b16 %v748
  %v1208 = vunpack.c.l.b16 %v749
  %v1209 = vunpack.c.h.b16 %v749
  %v1210 = vunpack.c.l.b16 %v750
  %v1211 = vunpack.c.h.b16 %v750
  %v1212 = vunpack.c.l.b16 %v751
  %v1213 = vunpack.c.l.b16 %v752
  %v1214 = vunpack.c.h.b16 %v752
  %v1215 = vunpack.c.l.b16 %v753
  %v1216 = vunpack.c.h.b16 %v753
  %v1217 = vunpack.c.l.b16 %v754
  %v1218 = vunpack.c.l.b16 %v755
  %v1219 = vunpack.c.h.b16 %v755
  %v1220 = vunpack.c.l.b16 %v756
  %v1221 = vunpack.c.h.b16 %v756
  %v1222 = vunpack.c.l.b16 %v757
  %v1223 = vunpack.c.l.b16 %v758
  %v1224 = vunpack.c.h.b16 %v758
  %v1225 = vunpack.c.l.b16 %v759
  %v1226 = vunpack.c.h.b16 %v759
  %v1227 = vunpack.c.l.b16 %v760
  %v1228 = vunpack.c.l.b16 %v761
  %v1229 = vunpack.c.h.b16 %v761
  %v1230 = vunpack.c.l.b16 %v762
  %v1231 = vunpack.c.h.b16 %v762
  %v1232 = vunpack.c.l.b16 %v763
  %v1233 = vunpack.c.l.b16 %v764
  %v1234 = vunpack.c.h.b16 %v764
  %v1235 = vunpack.c.l.b16 %v765
  %v1236 = vunpack.c.h.b16 %v765
  %v1237 = vunpack.c.l.b16 %v766
  %v1238 = vunpack.c.l.b16 %v767
  %v1239 = vunpack.c.h.b16 %v767
  %v1240 = vunpack.c.l.b16 %v768
  %v1241 = vunpack.c.h.b16 %v768
  %v1242 = vunpack.c.l.b16 %v769
  %v1243 = vunpack.c.l.b16 %v770
  %v1244 = vunpack.c.h.b16 %v770
  %v1245 = vunpack.c.l.b16 %v771
  %v1246 = vunpack.c.h.b16 %v771
  %v1247 = vunpack.c.l.b16 %v772
  %v1248 = vunpack.c.l.b16 %v773
  %v1249 = vunpack.c.h.b16 %v773
  %v1250 = vunpack.c.l.b16 %v774
  %v1251 = vunpack.c.h.b16 %v774
  %v1252 = vunpack.c.l.b16 %v775
  %v1253 = vunpack.c.l.b16 %v776
  %v1254 = vunpack.c.h.b16 %v776
  %v1255 = vunpack.c.l.b16 %v777
  %v1256 = vunpack.c.h.b16 %v777
  %v1257 = vunpack.c.l.b16 %v778
  %v1258 = vunpack.c.l.b16 %v779
  %v1259 = vunpack.c.h.b16 %v779
  %v1260 = vunpack.c.l.b16 %v780
  %v1261 = vunpack.c.h.b16 %v780
  %v1262 = vunpack.c.l.b16 %v781
  %v1263 = vunpack.c.l.b16 %v782
  %v1264 = vunpack.c.h.b16 %v782
  %v1265 = vunpack.c.l.b16 %v783
  %v1266 = vunpack.c.h.b16 %v783
  %v1267 = vunpack.c.l.b16 %v784
  %v1268 = vunpack.c.l.b16 %v785
  %v1269 = vunpack.c.h.b16 %v785
  %v1270 = vunpack.c.l.b16 %v786
  %v1271 = vunpack.c.h.b16 %v786
  %v1272 = vunpack.c.l.b16 %v787
  %v1273 = vunpack.c.l.b16 %v788
  %v1274 = vunpack.c.h.b16 %v788
  %v1275 = vunpack.c.l.b16 %v789
  %v1276 = vunpack.c.h.b16 %v789
  %v1277 = vunpack.c.l.b16 %v790
  %v1278 = vunpack.c.l.b16 %v791
  %v1279 = vunpack.c.h.b16 %v791
  %v1280 = vunpack.c.l.b16 %v792
  %v1281 = vunpack.c.h.b16 %v792
  %v1282 = vunpack.c.l.b16 %v793
  %v1283 = vunpack.c.l.b16 %v794
  %v1284 = vunpack.c.h.b16 %v794
  %v1285 = vunpack.c.l.b16 %v795
  %v1286 = vunpack.c.h.b16 %v795
  %v1287 = vunpack.c.l.b16 %v796
  %v1288 = vunpack.c.l.b16 %v797
  %v1289 = vunpack.c.h.b16 %v797
  %v1290 = vunpack.c.l.b16 %v798
  %v1291 = vunpack.c.h.b16 %v798
  %v1292 = vunpack.c.l.b16 %v799
  %v1293 = vunpack.c.l.b16 %v800
  %v1294 = vunpack.c.h.b16 %v800
  %v1295 = vunpack.c.l.b16 %v801
  %v1296 = vunpack.c.h.b16 %v801
  %v1297 = vunpack.c.l.b16 %v802
  %v1298 = vunpack.c.l.b16 %v803
  %v1299 = vunpack.c.h.b16 %v803
  %v1300 = vunpack.c.l.b16 %v804
  %v1301 = vunpack.c.h.b16 %v804
  %v1302 = vunpack.c.l.b16 %v805
  %v1303 = vunpack.c.l.b16 %v806
  %v1304 = vunpack.c.h.b16 %v806
  %v1305 = vunpack.c.l.b16 %v807
  %v1306 = vunpack.c.h.b16 %v807
  %v1307 = vunpack.c.l.b16 %v808
  %v1308 = vunpack.c.l.b16 %v809
  %v1309 = vunpack.c.h.b16 %v809
  %v1310 = vunpack.c.l.b16 %v810
  %v1311 = vunpack.c.h.b16 %v810
  %v1312 = vunpack.c.l.b16 %v811
  %v1313 = vunpack.c.l.b16 %v812
  %v1314 = vunpack.c.h.b16 %v812
  %v1315 = vunpack.c.l.b16 %v813
  %v1316 = vunpack.c.h.b16 %v813
  %v1317 = vunpack.c.l.b16 %v814
  %v1318 = vunpack.c.l.b16 %v815
  %v1319 = vunpack.c.h.b16 %v815
  %v1320 = vunpack.c.l.b16 %v816
  %v1321 = vunpack.c.h.b16 %v816
  %v1322 = vunpack.c.l.b16 %v817
  %v1323 = vunpack.c.l.b16 %v818
  %v1324 = vunpack.c.h.b16 %v818
  %v1325 = vunpack.c.l.b16 %v819
  %v1326 = vunpack.c.h.b16 %v819
  %v1327 = vunpack.c.l.b16 %v820
  %v1328 = vunpack.c.l.b16 %v821
  %v1329 = vunpack.c.h.b16 %v821
  %v1330 = vunpack.c.l.b16 %v822
  %v1331 = vunpack.c.h.b16 %v822
  %v1332 = vunpack.c.l.b16 %v823
  %v1333 = vunpack.c.l.b16 %v824
  %v1334 = vunpack.c.h.b16 %v824
  %v1335 = vunpack.c.l.b16 %v825
  %v1336 = vunpack.c.h.b16 %v825
  %v1337 = vunpack.c.l.b16 %v826
  %v1338 = vunpack.c.l.b16 %v827
  %v1339 = vunpack.c.h.b16 %v827
  %v1340 = vunpack.c.l.b16 %v828
  %v1341 = vunpack.c.h.b16 %v828
  %v1342 = vunpack.c.l.b16 %v829
  %v1343 = vunpack.c.l.b16 %v830
  %v1344 = vunpack.c.h.b16 %v830
  %v1345 = vunpack.c.l.b16 %v831
  %v1346 = vunpack.c.h.b16 %v831
  %v1347 = vunpack.c.l.b16 %v832
  %v1348 = vunpack.c.l.b16 %v833
  %v1349 = vunpack.c.h.b16 %v833
  %v1350 = vunpack.c.l.b16 %v834
  %v1351 = vunpack.c.h.b16 %v834
  %v1352 = vunpack.c.l.b16 %v835
  %v1353 = vunpack.c.l.b16 %v836
  %v1354 = vunpack.c.h.b16 %v836
  %v1355 = vunpack.c.l.b16 %v837
  %v1356 = vunpack.c.h.b16 %v837
  %v1357 = vunpack.c.l.b16 %v838
  %v1358 = vunpack.c.l.b16 %v839
  %v1359 = vunpack.c.h.b16 %v839
  %v1360 = vunpack.c.l.b16 %v840
  %v1361 = vunpack.c.h.b16 %v840
  %v1362 = vunpack.c.l.b16 %v841
  %v1363 = vunpack.c.l.b16 %v842
  %v1364 = vunpack.c.h.b16 %v842
  %v1365 = vunpack.c.l.b16 %v843
  %v1366 = vunpack.c.h.b16 %v843
  %v1367 = vunpack.c.l.b16 %v844
  %v1368 = vunpack.c.l.b16 %v845
  %v1369 = vunpack.c.h.b16 %v845
  %v1370 = vunpack.c.l.b16 %v846
  %v1371 = vunpack.c.h.b16 %v846
  %v1372 = vunpack.c.l.b16 %v847
  %v1373 = vunpack.c.l.b16 %v848
  %v1374 = vunpack.c.h.b16 %v848
  %v1375 = vunpack.c.l.b16 %v849
  %v1376 = vunpack.c.h.b16 %v849
  %v1377 = vunpack.c.l.b16 %v850
  %v1378 = vunpack.c.l.b16 %v851
  %v1379 = vunpack.c.h.b16 %v851
  %v1380 = vunpack.c.l.b16 %v852
  %v1381 = vunpack.c.h.b16 %v852
  %v1382 = vunpack.c.l.b16 %v853
  %v1383 = vunpack.c.l.b16 %v854
  %v1384 = vunpack.c.h.b16 %v854
  %v1385 = vunpack.c.l.b16 %v855
  %v1386 = vunpack.c.h.b16 %v855
  %v1387 = vunpack.c.l.b16 %v856
  %v1388 = vunpack.c.l.b16 %v857
  %v1389 = vunpack.c.h.b16 %v857
  %v1390 = vunpack.c.l.b16 %v858
  %v1391 = vunpack.c.h.b16 %v858
  %v1392 = vunpack.c.l.b16 %v859
  %v1393 = vunpack.c.l.b16 %v860
  %v1394 = vunpack.c.h.b16 %v860
  %v1395 = vunpack.c.l.b16 %v861
  %v1396 = vunpack.c.h.b16 %v861
  %v1397 = vunpack.c.l.b16 %v862
  %v1398 = vunpack.c.l.b16 %v863
  %v1399 = vunpack.c.h.b16 %v863
  %v1400 = vunpack.c.l.b16 %v864
  %v1401 = vunpack.c.h.b16 %v864
  %v1402 = vunpack.c.l.b16 %v865
  %v1403 = vunpack.c.l.b16 %v866
  %v1404 = vunpack.c.h.b16 %v866
  %v1405 = vunpack.c.l.b16 %v867
  %v1406 = vunpack.c.h.b16 %v867
  %v1407 = vunpack.c.l.b16 %v868
  %v1408 = vpack.c.b16 %v1093, %v1088
  %v1409 = vpack.c.b16 %v1094, %v1089
  %v1410 = vpack.c.b16 %v1095, %v1090
  %v1411 = vpack.c.b16 %v1096, %v1091
  %v1412 = vpack.c.b16 %v1097, %v1092
  %v1413 = vpack.c.b16 %v1103, %v1098
  %v1414 = vpack.c.b16 %v1104, %v1099
  %v1415 = vpack.c.b16 %v1105, %v1100
  %v1416 = vpack.c.b16 %v1106, %v1101
  %v1417 = vpack.c.b16 %v1107, %v1102
  %v1418 = vpack.c.b16 %v1113, %v1108
  %v1419 = vpack.c.b16 %v1114, %v1109
  %v1420 = vpack.c.b16 %v1115, %v1110
  %v1421 = vpack.c.b16 %v1116, %v1111
  %v1422 = vpack.c.b16 %v1117, %v1112
  %v1423 = vpack.c.b16 %v1123, %v1118
  %v1424 = vpack.c.b16 %v1124, %v1119
  %v1425 = vpack.c.b16 %v1125, %v1120
  %v1426 = vpack.c.b16 %v1126, %v1121
  %v1427 = vpack.c.b16 %v1127, %v1122
  %v1428 = vpack.c.b16 %v1133, %v1128
  %v1429 = vpack.c.b16 %v1134, %v1129
  %v1430 = vpack.c.b16 %v1135, %v1130
  %v1431 = vpack.c.b16 %v1136, %v1131
  %v1432 = vpack.c.b16 %v1137, %v1132
  %v1433 = vpack.c.b16 %v1143, %v1138
  %v1434 = vpack.c.b16 %v1144, %v1139
  %v1435 = vpack.c.b16 %v1145, %v1140
  %v1436 = vpack.c.b16 %v1146, %v1141
  %v1437 = vpack.c.b16 %v1147, %v1142
  %v1438 = vpack.c.b16 %v1153, %v1148
  %v1439 = vpack.c.b16 %v1154, %v1149
  %v1440 = vpack.c.b16 %v1155, %v1150
  %v1441 = vpack.c.b16 %v1156, %v1151
  %v1442 = vpack.c.b16 %v1157, %v1152
  %v1443 = vpack.c.b16 %v1163, %v1158
  %v1444 = vpack.c.b16 %v1164, %v1159
  %v1445 = vpack.c.b16 %v1165, %v1160
  %v1446 = vpack.c.b16 %v1166, %v1161
  %v1447 = vpack.c.b16 %v1167, %v1162
  %v1448 = vpack.c.b16 %v1173, %v1168
  %v1449 = vpack.c.b16 %v1174, %v1169
  %v1450 = vpack.c.b16 %v1175, %v1170
  %v1451 = vpack.c.b16 %v1176, %v1171
  %v1452 = vpack.c.b16 %v1177, %v1172
  %v1453 = vpack.c.b16 %v1183, %v1178
  %v1454 = vpack.c.b16 %v1184, %v1179
  %v1455 = vpack.c.b16 %v1185, %v1180
  %v1456 = vpack.c.b16 %v1186, %v1181
  %v1457 = vpack.c.b16 %v1187, %v1182
  %v1458 = vpack.c.b16 %v1193, %v1188
  %v1459 = vpack.c.b16 %v1194, %v1189
  %v1460 = vpack.c.b16 %v1195, %v1190
  %v1461 = vpack.c.b16 %v1196, %v1191
  %v1462 = vpack.c.b16 %v1197, %v1192
  %v1463 = vpack.c.b16 %v1203, %v1198
  %v1464 = vpack.c.b16 %v1204, %v1199
  %v1465 = vpack.c.b16 %v1205, %v1200
  %v1466 = vpack.c.b16 %v1206, %v1201
  %v1467 = vpack.c.b16 %v1207, %v1202
  %v1468 = vpack.c.b16 %v1213, %v1208
  %v1469 = vpack.c.b16 %v1214, %v1209
  %v1470 = vpack.c.b16 %v1215, %v1210
  %v1471 = vpack.c.b16 %v1216, %v1211
  %v1472 = vpack.c.b16 %v1217, %v1212
  %v1473 = vpack.c.b16 %v1223, %v1218
  %v1474 = vpack.c.b16 %v1224, %v1219
  %v1475 = vpack.c.b16 %v1225, %v1220
  %v1476 = vpack.c.b16 %v1226, %v1221
  %v1477 = vpack.c.b16 %v1227, %v1222
  %v1478 = vpack.c.b16 %v1233, %v1228
  %v1479 = vpack.c.b16 %v1234, %v1229
  %v1480 = vpack.c.b16 %v1235, %v1230
  %v1481 = vpack.c.b16 %v1236, %v1231
  %v1482 = vpack.c.b16 %v1237, %v1232
  %v1483 = vpack.c.b16 %v1243, %v1238
  %v1484 = vpack.c.b16 %v1244, %v1239
  %v1485 = vpack.c.b16 %v1245, %v1240
  %v1486 = vpack.c.b16 %v1246, %v1241
  %v1487 = vpack.c.b16 %v1247, %v1242
  %v1488 = vpack.c.b16 %v1253, %v1248
  %v1489 = vpack.c.b16 %v1254, %v1249
  %v1490 = vpack.c.b16 %v1255, %v1250
  %v1491 = vpack.c.b16 %v1256, %v1251
  %v1492 = vpack.c.b16 %v1257, %v1252
  %v1493 = vpack.c.b16 %v1263, %v1258
  %v1494 = vpack.c.b16 %v1264, %v1259
  %v1495 = vpack.c.b16 %v1265, %v1260
  %v1496 = vpack.c.b16 %v1266, %v1261
  %v1497 = vpack.c.b16 %v1267, %v1262
  %v1498 = vpack.c.b16 %v1273, %v1268
  %v1499 = vpack.c.b16 %v1274, %v1269
  %v1500 = vpack.c.b16 %v1275, %v1270
  %v1501 = vpack.c.b16 %v1276, %v1271
  %v1502 = vpack.c.b16 %v1277, %v1272
  %v1503 = vpack.c.b16 %v1283, %v1278
  %v1504 = vpack.c.b16 %v1284, %v1279
  %v1505 = vpack.c.b16 %v1285, %v1280
  %v1506 = vpack.c.b16 %v1286, %v1281
  %v1507 = vpack.c.b16 %v1287, %v1282
  %v1508 = vpack.c.b16 %v1293, %v1288
  %v1509 = vpack.c.b16 %v1294, %v1289
  %v1510 = vpack.c.b16 %v1295, %v1290
  %v1511 = vpack.c.b16 %v1296, %v1291
  %v1512 = vpack.c.b16 %v1297, %v1292
  %v1513 = vpack.c.b16 %v1303, %v1298
  %v1514 = vpack.c.b16 %v1304, %v1299
  %v1515 = vpack.c.b16 %v1305, %v1300
  %v1516 = vpack.c.b16 %v1306, %v1301
  %v1517 = vpack.c.b16 %v1307, %v1302
  %v1518 = vpack.c.b16 %v1313, %v1308
  %v1519 = vpack.c.b16 %v1314, %v1309
  %v1520 = vpack.c.b16 %v1315, %v1310
  %v1521 = vpack.c.b16 %v1316, %v1311
  %v1522 = vpack.c.b16 %v1317, %v1312
  %v1523 = vpack.c.b16 %v1323, %v1318
  %v1524 = vpack.c.b16 %v1324, %v1319
  %v1525 = vpack.c.b16 %v1325, %v1320
  %v1526 = vpack.c.b16 %v1326, %v1321
  %v1527 = vpack.c.b16 %v1327, %v1322
  %v1528 = vpack.c.b16 %v1333, %v1328
  %v1529 = vpack.c.b16 %v1334, %v1329
  %v1530 = vpack.c.b16 %v1335, %v1330
  %v1531 = vpack.c.b16 %v1336, %v1331
  %v1532 = vpack.c.b16 %v1337, %v1332
  %v1533 = vpack.c.b16 %v1343, %v1338
  %v1534 = vpack.c.b16 %v1344, %v1339
  %v1535 = vpack.c.b16 %v1345, %v1340
  %v1536 = vpack.c.b16 %v1346, %v1341
  %v1537 = vpack.c.b16 %v1347, %v1342
  %v1538 = vpack.c.b16 %v1353, %v1348
  %v1539 = vpack.c.b16 %v1354, %v1349
  %v1540 = vpack.c.b16 %v1355, %v1350
  %v1541 = vpack.c.b16 %v1356, %v1351
  %v1542 = vpack.c.b16 %v1357, %v1352
  %v1543 = vpack.c.b16 %v1363, %v1358
  %v1544 = vpack.c.b16 %v1364, %v1359
  %v1545 = vpack.c.b16 %v1365, %v1360
  %v1546 = vpack.c.b16 %v1366, %v1361
  %v1547 = vpack.c.b16 %v1367, %v1362
  %v1548 = vpack.c.b16 %v1373, %v1368
  %v1549 = vpack.c.b16 %v1374, %v1369
  %v1550 = vpack.c.b16 %v1375, %v1370
  %v1551 = vpack.c.b16 %v1376, %v1371
  %v1552 = vpack.c.b16 %v1377, %v1372
  %v1553 = vpack.c.b16 %v1383, %v1378
  %v1554 = vpack.c.b16 %v1384, %v1379
  %v1555 = vpack.c.b16 %v1385, %v1380
  %v1556 = vpack.c.b16 %v1386, %v1381
  %v1557 = vpack.c.b16 %v1387, %v1382
  %v1558 = vpack.c.b16 %v1393, %v1388
  %v1559 = vpack.c.b16 %v1394, %v1389
  %v1560 = vpack.c.b16 %v1395, %v1390
  %v1561 = vpack.c.b16 %v1396, %v1391
  %v1562 = vpack.c.b16 %v1397, %v1392
  %v1563 = vpack.c.b16 %v1403, %v1398
  %v1564 = vpack.c.b16 %v1404, %v1399
  %v1565 = vpack.c.b16 %v1405, %v1400
  %v1566 = vpack.c.b16 %v1406, %v1401
  %v1567 = vpack.c.b16 %v1407, %v1402
  %1728 = vmatprep.subr.bf16.mxu0 %v1409
  %1729 = vmatpush1.bf16.msra.mxu0 %v1408
  %1730 = vmatprep.subr.bf16.mxu0 %v1414
  %1731 = vmatpush1.bf16.msra.mxu0 %v1413
  %1732 = vmatprep.subr.bf16.mxu0 %v1419
  %1733 = vmatpush1.bf16.msra.mxu0 %v1418
  %1734 = vmatprep.subr.bf16.mxu0 %v1424
  %1735 = vmatpush1.bf16.msra.mxu0 %v1423
  %1736 = vmatprep.subr.bf16.mxu0 %v1429
  %1737 = vmatpush1.bf16.msra.mxu0 %v1428
  %1738 = vmatprep.subr.bf16.mxu0 %v1434
  %1739 = vmatpush1.bf16.msra.mxu0 %v1433
  %1740 = vmatprep.subr.bf16.mxu0 %v1439
  %1741 = vmatpush1.bf16.msra.mxu0 %v1438
  %1742 = vmatprep.subr.bf16.mxu0 %v1444
  %1743 = vmatpush1.bf16.msra.mxu0 %v1443
  %1744 = vmatprep.subr.bf16.mxu0 %v1449
  %1745 = vmatpush1.bf16.msra.mxu0 %v1448
  %1746 = vmatprep.subr.bf16.mxu0 %v1454
  %1747 = vmatpush1.bf16.msra.mxu0 %v1453
  %1748 = vmatprep.subr.bf16.mxu0 %v1459
  %1749 = vmatpush1.bf16.msra.mxu0 %v1458
  %1750 = vmatprep.subr.bf16.mxu0 %v1464
  %1751 = vmatpush1.bf16.msra.mxu0 %v1463
  %1752 = vmatprep.subr.bf16.mxu0 %v1469
  %1753 = vmatpush1.bf16.msra.mxu0 %v1468
  %1754 = vmatprep.subr.bf16.mxu0 %v1474
  %1755 = vmatpush1.bf16.msra.mxu0 %v1473
  %1756 = vmatprep.subr.bf16.mxu0 %v1479
  %1757 = vmatpush1.bf16.msra.mxu0 %v1478
  %1758 = vmatprep.subr.bf16.mxu0 %v1484
  %1759 = vmatpush1.bf16.msra.mxu0 %v1483
  %1760 = vmatprep.mubr.bf16.mxu0 %v674
  %1761 = vmatmul.mubr.bf16.gmra.mrb[0].mxu0 %v673
  %v1762 = vpop.f32.mrb[0].mxu0
  %v1763 = vadd.f32 %v874, %v1762
  %v1764 = vpop.f32.mrb[0].mxu0
  %v1765 = vadd.f32 %v878, %v1764
  %v1766 = vpop.f32.mrb[0].mxu0
  %v1767 = vpop.f32.mrb[0].mxu0
  %1768 = vdwg.mxu0
  %1769 = vmatprep.subr.bf16.mxu0 %v1489
  %1770 = vmatpush1.bf16.msra.mxu0 %v1488
  %1771 = vmatprep.subr.bf16.mxu0 %v1494
  %1772 = vmatpush1.bf16.msra.mxu0 %v1493
  %1773 = vmatprep.subr.bf16.mxu0 %v1499
  %1774 = vmatpush1.bf16.msra.mxu0 %v1498
  %1775 = vmatprep.subr.bf16.mxu0 %v1504
  %1776 = vmatpush1.bf16.msra.mxu0 %v1503
  %1777 = vmatprep.subr.bf16.mxu0 %v1509
  %1778 = vmatpush1.bf16.msra.mxu0 %v1508
  %1779 = vmatprep.subr.bf16.mxu0 %v1514
  %1780 = vmatpush1.bf16.msra.mxu0 %v1513
  %1781 = vmatprep.subr.bf16.mxu0 %v1519
  %1782 = vmatpush1.bf16.msra.mxu0 %v1518
  %1783 = vmatprep.subr.bf16.mxu0 %v1524
  %1784 = vmatpush1.bf16.msra.mxu0 %v1523
  %1785 = vmatprep.subr.bf16.mxu0 %v1529
  %1786 = vmatpush1.bf16.msra.mxu0 %v1528
  %1787 = vmatprep.subr.bf16.mxu0 %v1534
  %1788 = vmatpush1.bf16.msra.mxu0 %v1533
  %1789 = vmatprep.subr.bf16.mxu0 %v1539
  %1790 = vmatpush1.bf16.msra.mxu0 %v1538
  %1791 = vmatprep.subr.bf16.mxu0 %v1544
  %1792 = vmatpush1.bf16.msra.mxu0 %v1543
  %1793 = vmatprep.subr.bf16.mxu0 %v1549
  %1794 = vmatpush1.bf16.msra.mxu0 %v1548
  %1795 = vmatprep.subr.bf16.mxu0 %v1554
  %1796 = vmatpush1.bf16.msra.mxu0 %v1553
  %1797 = vmatprep.subr.bf16.mxu0 %v1559
  %1798 = vmatpush1.bf16.msra.mxu0 %v1558
  %1799 = vmatprep.subr.bf16.mxu0 %v1564
  %1800 = vmatpush1.bf16.msra.mxu0 %v1563
  %1801 = vmatprep.mubr.bf16.mxu0 %v676
  %1802 = vmatmul.mubr.bf16.gmra.mrb[0].mxu0 %v675
  %v1803 = vpop.f32.mrb[0].mxu0
  %v1804 = vadd.f32 %v1763, %v1803
  %v1805 = vpop.f32.mrb[0].mxu0
  %v1806 = vadd.f32 %v1765, %v1805
  %v1807 = vpop.f32.mrb[0].mxu0
  %v1808 = vpop.f32.mrb[0].mxu0
  %1809 = vdwg.mxu0
  %1810 = vmatprep.subr.bf16.mxu0 %v1411
  %1811 = vmatpush1.bf16.msra.mxu0 %v1410
  %1812 = vmatprep.subr.bf16.mxu0 %v1416
  %1813 = vmatpush1.bf16.msra.mxu0 %v1415
  %1814 = vmatprep.subr.bf16.mxu0 %v1421
  %1815 = vmatpush1.bf16.msra.mxu0 %v1420
  %1816 = vmatprep.subr.bf16.mxu0 %v1426
  %1817 = vmatpush1.bf16.msra.mxu0 %v1425
  %1818 = vmatprep.subr.bf16.mxu0 %v1431
  %1819 = vmatpush1.bf16.msra.mxu0 %v1430
  %1820 = vmatprep.subr.bf16.mxu0 %v1436
  %1821 = vmatpush1.bf16.msra.mxu0 %v1435
  %1822 = vmatprep.subr.bf16.mxu0 %v1441
  %1823 = vmatpush1.bf16.msra.mxu0 %v1440
  %1824 = vmatprep.subr.bf16.mxu0 %v1446
  %1825 = vmatpush1.bf16.msra.mxu0 %v1445
  %1826 = vmatprep.subr.bf16.mxu0 %v1451
  %1827 = vmatpush1.bf16.msra.mxu0 %v1450
  %1828 = vmatprep.subr.bf16.mxu0 %v1456
  %1829 = vmatpush1.bf16.msra.mxu0 %v1455
  %1830 = vmatprep.subr.bf16.mxu0 %v1461
  %1831 = vmatpush1.bf16.msra.mxu0 %v1460
  %1832 = vmatprep.subr.bf16.mxu0 %v1466
  %1833 = vmatpush1.bf16.msra.mxu0 %v1465
  %1834 = vmatprep.subr.bf16.mxu0 %v1471
  %1835 = vmatpush1.bf16.msra.mxu0 %v1470
  %1836 = vmatprep.subr.bf16.mxu0 %v1476
  %1837 = vmatpush1.bf16.msra.mxu0 %v1475
  %1838 = vmatprep.subr.bf16.mxu0 %v1481
  %1839 = vmatpush1.bf16.msra.mxu0 %v1480
  %1840 = vmatprep.subr.bf16.mxu0 %v1486
  %1841 = vmatpush1.bf16.msra.mxu0 %v1485
  %1842 = vmatprep.mubr.bf16.mxu0 %v674
  %1843 = vmatmul.mubr.bf16.gmra.mrb[0].mxu0 %v673
  %v1844 = vpop.f32.mrb[0].mxu0
  %v1845 = vadd.f32 %v882, %v1844
  %v1846 = vpop.f32.mrb[0].mxu0
  %v1847 = vadd.f32 %v886, %v1846
  %v1848 = vpop.f32.mrb[0].mxu0
  %v1849 = vpop.f32.mrb[0].mxu0
  %1850 = vdwg.mxu0
  %1851 = vmatprep.subr.bf16.mxu0 %v1491
  %1852 = vmatpush1.bf16.msra.mxu0 %v1490
  %1853 = vmatprep.subr.bf16.mxu0 %v1496
  %1854 = vmatpush1.bf16.msra.mxu0 %v1495
  %1855 = vmatprep.subr.bf16.mxu0 %v1501
  %1856 = vmatpush1.bf16.msra.mxu0 %v1500
  %1857 = vmatprep.subr.bf16.mxu0 %v1506
  %1858 = vmatpush1.bf16.msra.mxu0 %v1505
  %1859 = vmatprep.subr.bf16.mxu0 %v1511
  %1860 = vmatpush1.bf16.msra.mxu0 %v1510
  %1861 = vmatprep.subr.bf16.mxu0 %v1516
  %1862 = vmatpush1.bf16.msra.mxu0 %v1515
  %1863 = vmatprep.subr.bf16.mxu0 %v1521
  %1864 = vmatpush1.bf16.msra.mxu0 %v1520
  %1865 = vmatprep.subr.bf16.mxu0 %v1526
  %1866 = vmatpush1.bf16.msra.mxu0 %v1525
  %1867 = vmatprep.subr.bf16.mxu0 %v1531
  %1868 = vmatpush1.bf16.msra.mxu0 %v1530
  %1869 = vmatprep.subr.bf16.mxu0 %v1536
  %1870 = vmatpush1.bf16.msra.mxu0 %v1535
  %1871 = vmatprep.subr.bf16.mxu0 %v1541
  %1872 = vmatpush1.bf16.msra.mxu0 %v1540
  %1873 = vmatprep.subr.bf16.mxu0 %v1546
  %1874 = vmatpush1.bf16.msra.mxu0 %v1545
  %1875 = vmatprep.subr.bf16.mxu0 %v1551
  %1876 = vmatpush1.bf16.msra.mxu0 %v1550
  %1877 = vmatprep.subr.bf16.mxu0 %v1556
  %1878 = vmatpush1.bf16.msra.mxu0 %v1555
  %1879 = vmatprep.subr.bf16.mxu0 %v1561
  %1880 = vmatpush1.bf16.msra.mxu0 %v1560
  %1881 = vmatprep.subr.bf16.mxu0 %v1566
  %1882 = vmatpush1.bf16.msra.mxu0 %v1565
  %1883 = vmatprep.mubr.bf16.mxu0 %v676
  %1884 = vmatmul.mubr.bf16.gmra.mrb[0].mxu0 %v675
  %v1885 = vpop.f32.mrb[0].mxu0
  %v1886 = vadd.f32 %v1845, %v1885
  %v1887 = vpop.f32.mrb[0].mxu0
  %v1888 = vadd.f32 %v1847, %v1887
  %v1889 = vpop.f32.mrb[0].mxu0
  %v1890 = vpop.f32.mrb[0].mxu0
  %1891 = vdwg.mxu0
  %1892 = vmatprep.subr.bf16.mxu0 0
  %1893 = vmatpush1.bf16.msra.mxu0 %v1412
  %1894 = vmatprep.subr.bf16.mxu0 0
  %1895 = vmatpush1.bf16.msra.mxu0 %v1417
  %1896 = vmatprep.subr.bf16.mxu0 0
  %1897 = vmatpush1.bf16.msra.mxu0 %v1422
  %1898 = vmatprep.subr.bf16.mxu0 0
  %1899 = vmatpush1.bf16.msra.mxu0 %v1427
  %1900 = vmatprep.subr.bf16.mxu0 0
  %1901 = vmatpush1.bf16.msra.mxu0 %v1432
  %1902 = vmatprep.subr.bf16.mxu0 0
  %1903 = vmatpush1.bf16.msra.mxu0 %v1437
  %1904 = vmatprep.subr.bf16.mxu0 0
  %1905 = vmatpush1.bf16.msra.mxu0 %v1442
  %1906 = vmatprep.subr.bf16.mxu0 0
  %1907 = vmatpush1.bf16.msra.mxu0 %v1447
  %1908 = vmatprep.subr.bf16.mxu0 0
  %1909 = vmatpush1.bf16.msra.mxu0 %v1452
  %1910 = vmatprep.subr.bf16.mxu0 0
  %1911 = vmatpush1.bf16.msra.mxu0 %v1457
  %1912 = vmatprep.subr.bf16.mxu0 0
  %1913 = vmatpush1.bf16.msra.mxu0 %v1462
  %1914 = vmatprep.subr.bf16.mxu0 0
  %1915 = vmatpush1.bf16.msra.mxu0 %v1467
  %1916 = vmatprep.subr.bf16.mxu0 0
  %1917 = vmatpush1.bf16.msra.mxu0 %v1472
  %1918 = vmatprep.subr.bf16.mxu0 0
  %1919 = vmatpush1.bf16.msra.mxu0 %v1477
  %1920 = vmatprep.subr.bf16.mxu0 0
  %1921 = vmatpush1.bf16.msra.mxu0 %v1482
  %1922 = vmatprep.subr.bf16.mxu0 0
  %1923 = vmatpush1.bf16.msra.mxu0 %v1487
  %1924 = vmatprep.mubr.bf16.mxu0 %v674
  %1925 = vmatmul.mubr.bf16.gmra.mrb[0].mxu0 %v673
  %v1926 = vpop.f32.mrb[0].mxu0
  %v1927 = vadd.f32 %v890, %v1926
  %v1928 = vpop.f32.mrb[0].mxu0
  %v1929 = vpop.f32.mrb[0].mxu0
  %v1930 = vpop.f32.mrb[0].mxu0
  %1931 = vdwg.mxu0
  %1932 = vmatprep.subr.bf16.mxu0 0
  %1933 = vmatpush1.bf16.msra.mxu0 %v1492
  %1934 = vmatprep.subr.bf16.mxu0 0
  %1935 = vmatpush1.bf16.msra.mxu0 %v1497
  %1936 = vmatprep.subr.bf16.mxu0 0
  %1937 = vmatpush1.bf16.msra.mxu0 %v1502
  %1938 = vmatprep.subr.bf16.mxu0 0
  %1939 = vmatpush1.bf16.msra.mxu0 %v1507
  %1940 = vmatprep.subr.bf16.mxu0 0
  %1941 = vmatpush1.bf16.msra.mxu0 %v1512
  %1942 = vmatprep.subr.bf16.mxu0 0
  %1943 = vmatpush1.bf16.msra.mxu0 %v1517
  %1944 = vmatprep.subr.bf16.mxu0 0
  %1945 = vmatpush1.bf16.msra.mxu0 %v1522
  %1946 = vmatprep.subr.bf16.mxu0 0
  %1947 = vmatpush1.bf16.msra.mxu0 %v1527
  %1948 = vmatprep.subr.bf16.mxu0 0
  %1949 = vmatpush1.bf16.msra.mxu0 %v1532
  %1950 = vmatprep.subr.bf16.mxu0 0
  %1951 = vmatpush1.bf16.msra.mxu0 %v1537
  %1952 = vmatprep.subr.bf16.mxu0 0
  %1953 = vmatpush1.bf16.msra.mxu0 %v1542
  %1954 = vmatprep.subr.bf16.mxu0 0
  %1955 = vmatpush1.bf16.msra.mxu0 %v1547
  %1956 = vmatprep.subr.bf16.mxu0 0
  %1957 = vmatpush1.bf16.msra.mxu0 %v1552
  %1958 = vmatprep.subr.bf16.mxu0 0
  %1959 = vmatpush1.bf16.msra.mxu0 %v1557
  %1960 = vmatprep.subr.bf16.mxu0 0
  %1961 = vmatpush1.bf16.msra.mxu0 %v1562
  %1962 = vmatprep.subr.bf16.mxu0 0
  %1963 = vmatpush1.bf16.msra.mxu0 %v1567
  %1964 = vmatprep.mubr.bf16.mxu0 %v676
  %1965 = vmatmul.mubr.bf16.gmra.mrb[0].mxu0 %v675
  %v1966 = vpop.f32.mrb[0].mxu0
  %v1967 = vadd.f32 %v1927, %v1966
  %v1968 = vpop.f32.mrb[0].mxu0
  %v1969 = vpop.f32.mrb[0].mxu0
  %v1970 = vpop.f32.mrb[0].mxu0
  %1971 = vdwg.mxu0
  %v1972 = vmul.f32 %v1804, 0.5
  %v1973 = vmul.f32 %v1806, 0.5
  %v1974 = vmul.f32 %v1886, 0.5
  %v1975 = vmul.f32 %v1888, 0.5
  %v1976 = vmul.f32 %v1967, 0.5
  %v1977 = vtanh.pop %v1972
  %v1978 = vtanh.pop %v1973
  %v1979 = vtanh.pop %v1974
  %v1980 = vtanh.pop %v1975
  %v1981 = vtanh.pop %v1976
  %v1982 = vadd.f32 %v1977, 1.0
  %v1983 = vadd.f32 %v1978, 1.0
  %v1984 = vadd.f32 %v1979, 1.0
  %v1985 = vadd.f32 %v1980, 1.0
  %v1986 = vadd.f32 %v1981, 1.0
  %v1987 = vmul.f32 %v1982, 0.5
  %v1988 = vmul.f32 %v1983, 0.5
  %v1989 = vmul.f32 %v1984, 0.5
  %v1990 = vmul.f32 %v1985, 0.5
  %v1991 = vmul.f32 %v1986, 0.5
  %1992 = vst [vmem:[%s7] sm:$0xff] %v1987
  %1993 = vst [vmem:[%s7 + $0x8] sm:$0xff] %v1988
  %1994 = vst [vmem:[%s7 + $0x10] sm:$0xff] %v1989
  %1995 = vst [vmem:[%s7 + $0x18] sm:$0xff] %v1990
  %vm1996 = vcmask 621568
  %1997 = vst.msk [vmem:[%s7 + $0x20] sm:$0xff] %vm1996, %v1991
  // Predicated region
  $region30: #{conditional_gan_forward.1} parent=0 // pred_check
    _
  $region31: #{conditional_gan_forward.1} parent=0 // pred_check_branch
    %1999 = sbr.rel (0) target = $region33
  $region32: #{conditional_gan_forward.1} parent=0 // pred_region
    _
  $region33: #{conditional_gan_forward.1} parent=0 // pred_fallthru
    _
  // Predicated region
  $region34: #{conditional_gan_forward.1} parent=0 // pred_check
    _
  $region35: #{conditional_gan_forward.1} parent=0 // pred_check_branch
    %2001 = sbr.rel (0) target = $region37
  $region36: #{conditional_gan_forward.1} parent=0 // pred_region
    _
  $region37: #{conditional_gan_forward.1} parent=0 // pred_fallthru
    _

</llo_original>
